<compile_context>
chip_gen: v7x
topology: tpu7x:2x2x1
jax: 0.10.0
libtpu: 0.0.40
codegen_flags: <defaults>
</compile_context>

<pallas_src>
from functools import partial

import jax
import jax.numpy as jnp
from jax.experimental import pallas as pl
from jax.experimental.pallas import tpu as pltpu


def _dwconv_kernel(x_ref, up_ref, dn_ref, w_ref, b_ref, o_ref, xpad_ref, *, TH, W):
    # x_ref   : (1, TH, W, C)   body rows of this tile
    # up_ref  : (1, 1, W, C)    row above the tile (zeros at the image top)
    # dn_ref  : (1, 1, W, C)    row below the tile (zeros at the image bottom)
    # w_ref   : (3, 3, C)       depthwise taps, tap-major, channel-last (f32)
    # b_ref   : (1, 1, C)       bias (f32)
    # o_ref   : (1, TH, W, C)
    # xpad_ref: (TH+2, W+2, C)  VMEM scratch holding the zero-padded tile
    C = x_ref.shape[-1]
    dt = xpad_ref.dtype

    # --- assemble the padded tile in VMEM (no HBM-side padding copy) ----------
    zcol = jnp.zeros((TH + 2, 1, C), dt)
    xpad_ref[:, 0:1, :] = zcol                       # left zero column
    xpad_ref[:, W + 1:W + 2, :] = zcol               # right zero column
    xpad_ref[0:1, 1:W + 1, :] = up_ref[0]            # halo row above
    xpad_ref[1:TH + 1, 1:W + 1, :] = x_ref[0]        # body rows
    xpad_ref[TH + 1:TH + 2, 1:W + 1, :] = dn_ref[0]  # halo row below

    # --- 9-tap depthwise MAC; f32 accumulate, bias-initialized ----------------
    acc = jnp.broadcast_to(b_ref[...].astype(jnp.float32), (TH, W, C))
    for kh in range(3):
        for kw in range(3):
            # shifted window read straight from the VMEM ref (offset vector loads,
            # no materialized padded / shifted f32 copies of the whole tile)
            win = xpad_ref[kh:kh + TH, kw:kw + W, :].astype(jnp.float32)
            acc = acc + win * w_ref[kh, kw, :].astype(jnp.float32)

    o_ref[0] = acc.astype(o_ref.dtype)


def _pick_row_tile(H, W, C, itemsize, target_bytes=2 * 1024 * 1024):
    """Largest divisor of H whose (TH, W, C) input block fits target_bytes.

    ~2 MiB per input block => with double-buffered in/out blocks + scratch +
    the f32 accumulator the per-step working set stays well under the 32 MiB
    scoped-VMEM limit we request (safe on v5e/v6e and on v7x's 64 MiB VMEM).
    """
    for th in range(H, 0, -1):
        if H % th == 0 and th * W * C * itemsize <= target_bytes:
            return th
    return 1


def dwconv(x, weight, bias, H, W):
    """x: (B, N, C); weight: (C, 1, 3, 3) [PyTorch depthwise layout]; bias: (C,)."""
    B, N, C = x.shape
    assert N == H * W, "N must equal H*W"

    x_nhwc = x.reshape(B, H, W, C)                    # free reshape, no transpose

    TH = _pick_row_tile(H, W, C, x.dtype.itemsize)
    nH = H // TH

    # Tiny halo-row arrays: row above / below each row-block (zeros at borders).
    # Total extra HBM traffic ~ 2/TH of x, vs. a full padded copy previously.
    zero_row = jnp.zeros((B, 1, W, C), x.dtype)
    up = jnp.concatenate([zero_row, x_nhwc[:, TH - 1::TH][:, :nH - 1]], axis=1)
    dn = jnp.concatenate([x_nhwc[:, TH::TH], zero_row], axis=1)   # (B, nH, W, C)

    w = jnp.transpose(weight[:, 0, :, :], (1, 2, 0)).astype(jnp.float32)  # (3, 3, C)
    b = bias.reshape(1, 1, C).astype(jnp.float32)

    kernel = partial(_dwconv_kernel, TH=TH, W=W)
    out = pl.pallas_call(
        kernel,
        out_shape=jax.ShapeDtypeStruct((B, H, W, C), x.dtype),
        grid=(B, nH),
        in_specs=[
            pl.BlockSpec((1, TH, W, C), lambda bb, i: (bb, i, 0, 0)),   # x rows
            pl.BlockSpec((1, 1, W, C), lambda bb, i: (bb, i, 0, 0)),    # halo up
            pl.BlockSpec((1, 1, W, C), lambda bb, i: (bb, i, 0, 0)),    # halo down
            pl.BlockSpec((3, 3, C), lambda bb, i: (0, 0, 0)),           # weights
            pl.BlockSpec((1, 1, C), lambda bb, i: (0, 0, 0)),           # bias
        ],
        out_specs=pl.BlockSpec((1, TH, W, C), lambda bb, i: (bb, i, 0, 0)),
        scratch_shapes=[pltpu.VMEM((TH + 2, W + 2, C), x.dtype)],
        compiler_params=pltpu.CompilerParams(
            dimension_semantics=("parallel", "parallel"),
            vmem_limit_bytes=32 * 1024 * 1024,
        ),
    )(x_nhwc, up, dn, w, b)
    return out.reshape(B, N, C)


def _reference_dwconv(x, weight, bias, H, W):
    """Pure-JAX reference matching the PyTorch module exactly (NCHW depthwise conv)."""
    B, N, C = x.shape
    x_nchw = jnp.transpose(x, (0, 2, 1)).reshape(B, C, H, W)
    y = jax.lax.conv_general_dilated(
        x_nchw.astype(jnp.float32),
        weight.astype(jnp.float32),                  # (C, 1, 3, 3)
        window_strides=(1, 1),
        padding=((1, 1), (1, 1)),
        dimension_numbers=("NCHW", "OIHW", "NCHW"),
        feature_group_count=C,
    ) + bias.reshape(1, C, 1, 1).astype(jnp.float32)
    return jnp.transpose(y.reshape(B, C, N), (0, 2, 1)).astype(x.dtype)


if __name__ == "__main__":
    B, C, Hh, Ww = 2, 4, 16, 16
    N = Hh * Ww

    key = jax.random.PRNGKey(0)
    kx, kw, kb = jax.random.split(key, 3)
    x = jax.random.normal(kx, (B, N, C), dtype=jnp.float32)
    # Parameter shapes matching nn.Conv2d(dim, dim, 3, 1, 1, bias=True, groups=dim)
    weight = jax.random.normal(kw, (C, 1, 3, 3), dtype=jnp.float32) * 0.1
    bias = jax.random.normal(kb, (C,), dtype=jnp.float32) * 0.1

    out = dwconv(x, weight, bias, Hh, Ww)
    out = jax.block_until_ready(out)

    ref = jax.block_until_ready(_reference_dwconv(x, weight, bias, Hh, Ww))
    assert out.shape == (B, N, C)
    assert jnp.allclose(out, ref, atol=1e-5, rtol=1e-5), "mismatch vs reference"

    print("KERNEL_OK")
</pallas_src>

<mosaic_0001>
module attributes {stable_mosaic.version = 11 : i64} {
  func.func @_dwconv_kernel(%arg0: i32, %arg1: i32, %arg2: memref<1x16x16x4xf32, #tpu.memory_space<vmem>>, %arg3: memref<1x1x16x4xf32, #tpu.memory_space<vmem>>, %arg4: memref<1x1x16x4xf32, #tpu.memory_space<vmem>>, %arg5: memref<3x3x4xf32, #tpu.memory_space<vmem>>, %arg6: memref<1x1x4xf32, #tpu.memory_space<vmem>>, %arg7: memref<1x16x16x4xf32, #tpu.memory_space<vmem>>, %arg8: memref<18x18x4xf32, #tpu.memory_space<vmem>>) attributes {dimension_semantics = [#tpu.dimension_semantics<parallel>, #tpu.dimension_semantics<parallel>], iteration_bounds = array<i64: 2, 1>, scalar_prefetch = 0 : i64, scratch_operands = 1 : i64, tpu.core_type = #tpu.core_type<tc>, window_params = [{transform_indices = @transform_0, window_bounds = array<i64: 1, 16, 16, 4>}, {transform_indices = @transform_1, window_bounds = array<i64: 1, 1, 16, 4>}, {transform_indices = @transform_2, window_bounds = array<i64: 1, 1, 16, 4>}, {pipeline_mode = #tpu.pipeline_mode<synchronous>, transform_indices = @transform_3, window_bounds = array<i64: 3, 3, 4>}, {pipeline_mode = #tpu.pipeline_mode<synchronous>, transform_indices = @transform_4, window_bounds = array<i64: 1, 1, 4>}, {transform_indices = @transform_5, window_bounds = array<i64: 1, 16, 16, 4>}]} {
    %cst = arith.constant 0.000000e+00 : f32
    %0 = vector.broadcast %cst : f32 to vector<18x1x4xf32>
    %c0 = arith.constant 0 : index
    %c0_0 = arith.constant 0 : index
    %c0_1 = arith.constant 0 : index
    %1 = vector.load %arg8[%c0, %c0_0, %c0_1] : memref<18x18x4xf32, #tpu.memory_space<vmem>>, vector<18x1x4xf32>
    tpu.vector_store %arg8[%c0, %c0_0, %c0_1], %0 {strides = array<i32>} : memref<18x18x4xf32, #tpu.memory_space<vmem>>, vector<18x1x4xf32>,
    %c0_2 = arith.constant 0 : index
    %c17 = arith.constant 17 : index
    %c0_3 = arith.constant 0 : index
    %2 = vector.load %arg8[%c0_2, %c17, %c0_3] : memref<18x18x4xf32, #tpu.memory_space<vmem>>, vector<18x1x4xf32>
    tpu.vector_store %arg8[%c0_2, %c17, %c0_3], %0 {strides = array<i32>} : memref<18x18x4xf32, #tpu.memory_space<vmem>>, vector<18x1x4xf32>,
    %c0_4 = arith.constant 0 : index
    %c0_5 = arith.constant 0 : index
    %c0_6 = arith.constant 0 : index
    %c0_7 = arith.constant 0 : index
    %3 = vector.load %arg3[%c0_4, %c0_5, %c0_6, %c0_7] : memref<1x1x16x4xf32, #tpu.memory_space<vmem>>, vector<1x1x16x4xf32>
    %4 = vector.shape_cast %3 : vector<1x1x16x4xf32> to vector<1x16x4xf32>
    %c0_8 = arith.constant 0 : index
    %c1 = arith.constant 1 : index
    %c0_9 = arith.constant 0 : index
    %5 = vector.load %arg8[%c0_8, %c1, %c0_9] : memref<18x18x4xf32, #tpu.memory_space<vmem>>, vector<1x16x4xf32>
    tpu.vector_store %arg8[%c0_8, %c1, %c0_9], %4 {strides = array<i32>} : memref<18x18x4xf32, #tpu.memory_space<vmem>>, vector<1x16x4xf32>,
    %c0_10 = arith.constant 0 : index
    %c0_11 = arith.constant 0 : index
    %c0_12 = arith.constant 0 : index
    %c0_13 = arith.constant 0 : index
    %6 = vector.load %arg2[%c0_10, %c0_11, %c0_12, %c0_13] : memref<1x16x16x4xf32, #tpu.memory_space<vmem>>, vector<1x16x16x4xf32>
    %7 = vector.shape_cast %6 : vector<1x16x16x4xf32> to vector<16x16x4xf32>
    %c1_14 = arith.constant 1 : index
    %c1_15 = arith.constant 1 : index
    %c0_16 = arith.constant 0 : index
    %8 = vector.load %arg8[%c1_14, %c1_15, %c0_16] : memref<18x18x4xf32, #tpu.memory_space<vmem>>, vector<16x16x4xf32>
    tpu.vector_store %arg8[%c1_14, %c1_15, %c0_16], %7 {strides = array<i32>} : memref<18x18x4xf32, #tpu.memory_space<vmem>>, vector<16x16x4xf32>,
    %c0_17 = arith.constant 0 : index
    %c0_18 = arith.constant 0 : index
    %c0_19 = arith.constant 0 : index
    %c0_20 = arith.constant 0 : index
    %9 = vector.load %arg4[%c0_17, %c0_18, %c0_19, %c0_20] : memref<1x1x16x4xf32, #tpu.memory_space<vmem>>, vector<1x1x16x4xf32>
    %10 = vector.shape_cast %9 : vector<1x1x16x4xf32> to vector<1x16x4xf32>
    %c17_21 = arith.constant 17 : index
    %c1_22 = arith.constant 1 : index
    %c0_23 = arith.constant 0 : index
    %11 = vector.load %arg8[%c17_21, %c1_22, %c0_23] : memref<18x18x4xf32, #tpu.memory_space<vmem>>, vector<1x16x4xf32>
    tpu.vector_store %arg8[%c17_21, %c1_22, %c0_23], %10 {strides = array<i32>} : memref<18x18x4xf32, #tpu.memory_space<vmem>>, vector<1x16x4xf32>,
    %c0_24 = arith.constant 0 : index
    %c0_25 = arith.constant 0 : index
    %c0_26 = arith.constant 0 : index
    %12 = vector.load %arg6[%c0_24, %c0_25, %c0_26] : memref<1x1x4xf32, #tpu.memory_space<vmem>>, vector<1x1x4xf32>
    %13 = vector.shape_cast %12 : vector<1x1x4xf32> to vector<1x1x4xf32>
    %14 = vector.broadcast %13 : vector<1x1x4xf32> to vector<16x16x4xf32>
    %c0_27 = arith.constant 0 : index
    %c0_28 = arith.constant 0 : index
    %c0_29 = arith.constant 0 : index
    %15 = vector.load %arg8[%c0_27, %c0_28, %c0_29] : memref<18x18x4xf32, #tpu.memory_space<vmem>>, vector<16x16x4xf32>
    %c0_30 = arith.constant 0 : index
    %c0_31 = arith.constant 0 : index
    %c0_32 = arith.constant 0 : index
    %16 = vector.load %arg5[%c0_30, %c0_31, %c0_32] : memref<3x3x4xf32, #tpu.memory_space<vmem>>, vector<1x1x4xf32>
    %17 = vector.shape_cast %16 : vector<1x1x4xf32> to vector<4xf32>
    %18 = vector.shape_cast %17 : vector<4xf32> to vector<1x1x4xf32>
    %19 = vector.broadcast %18 : vector<1x1x4xf32> to vector<16x16x4xf32>
    %20 = arith.mulf %15, %19 : vector<16x16x4xf32>
    %21 = arith.addf %14, %20 : vector<16x16x4xf32>
    %c0_33 = arith.constant 0 : index
    %c1_34 = arith.constant 1 : index
    %c0_35 = arith.constant 0 : index
    %22 = vector.load %arg8[%c0_33, %c1_34, %c0_35] : memref<18x18x4xf32, #tpu.memory_space<vmem>>, vector<16x16x4xf32>
    %c0_36 = arith.constant 0 : index
    %c1_37 = arith.constant 1 : index
    %c0_38 = arith.constant 0 : index
    %23 = vector.load %arg5[%c0_36, %c1_37, %c0_38] : memref<3x3x4xf32, #tpu.memory_space<vmem>>, vector<1x1x4xf32>
    %24 = vector.shape_cast %23 : vector<1x1x4xf32> to vector<4xf32>
    %25 = vector.shape_cast %24 : vector<4xf32> to vector<1x1x4xf32>
    %26 = vector.broadcast %25 : vector<1x1x4xf32> to vector<16x16x4xf32>
    %27 = arith.mulf %22, %26 : vector<16x16x4xf32>
    %28 = arith.addf %21, %27 : vector<16x16x4xf32>
    %c0_39 = arith.constant 0 : index
    %c2 = arith.constant 2 : index
    %c0_40 = arith.constant 0 : index
    %29 = vector.load %arg8[%c0_39, %c2, %c0_40] : memref<18x18x4xf32, #tpu.memory_space<vmem>>, vector<16x16x4xf32>
    %c0_41 = arith.constant 0 : index
    %c2_42 = arith.constant 2 : index
    %c0_43 = arith.constant 0 : index
    %30 = vector.load %arg5[%c0_41, %c2_42, %c0_43] : memref<3x3x4xf32, #tpu.memory_space<vmem>>, vector<1x1x4xf32>
    %31 = vector.shape_cast %30 : vector<1x1x4xf32> to vector<4xf32>
    %32 = vector.shape_cast %31 : vector<4xf32> to vector<1x1x4xf32>
    %33 = vector.broadcast %32 : vector<1x1x4xf32> to vector<16x16x4xf32>
    %34 = arith.mulf %29, %33 : vector<16x16x4xf32>
    %35 = arith.addf %28, %34 : vector<16x16x4xf32>
    %c1_44 = arith.constant 1 : index
    %c0_45 = arith.constant 0 : index
    %c0_46 = arith.constant 0 : index
    %36 = vector.load %arg8[%c1_44, %c0_45, %c0_46] : memref<18x18x4xf32, #tpu.memory_space<vmem>>, vector<16x16x4xf32>
    %c1_47 = arith.constant 1 : index
    %c0_48 = arith.constant 0 : index
    %c0_49 = arith.constant 0 : index
    %37 = vector.load %arg5[%c1_47, %c0_48, %c0_49] : memref<3x3x4xf32, #tpu.memory_space<vmem>>, vector<1x1x4xf32>
    %38 = vector.shape_cast %37 : vector<1x1x4xf32> to vector<4xf32>
    %39 = vector.shape_cast %38 : vector<4xf32> to vector<1x1x4xf32>
    %40 = vector.broadcast %39 : vector<1x1x4xf32> to vector<16x16x4xf32>
    %41 = arith.mulf %36, %40 : vector<16x16x4xf32>
    %42 = arith.addf %35, %41 : vector<16x16x4xf32>
    %c1_50 = arith.constant 1 : index
    %c1_51 = arith.constant 1 : index
    %c0_52 = arith.constant 0 : index
    %43 = vector.load %arg8[%c1_50, %c1_51, %c0_52] : memref<18x18x4xf32, #tpu.memory_space<vmem>>, vector<16x16x4xf32>
    %c1_53 = arith.constant 1 : index
    %c1_54 = arith.constant 1 : index
    %c0_55 = arith.constant 0 : index
    %44 = vector.load %arg5[%c1_53, %c1_54, %c0_55] : memref<3x3x4xf32, #tpu.memory_space<vmem>>, vector<1x1x4xf32>
    %45 = vector.shape_cast %44 : vector<1x1x4xf32> to vector<4xf32>
    %46 = vector.shape_cast %45 : vector<4xf32> to vector<1x1x4xf32>
    %47 = vector.broadcast %46 : vector<1x1x4xf32> to vector<16x16x4xf32>
    %48 = arith.mulf %43, %47 : vector<16x16x4xf32>
    %49 = arith.addf %42, %48 : vector<16x16x4xf32>
    %c1_56 = arith.constant 1 : index
    %c2_57 = arith.constant 2 : index
    %c0_58 = arith.constant 0 : index
    %50 = vector.load %arg8[%c1_56, %c2_57, %c0_58] : memref<18x18x4xf32, #tpu.memory_space<vmem>>, vector<16x16x4xf32>
    %c1_59 = arith.constant 1 : index
    %c2_60 = arith.constant 2 : index
    %c0_61 = arith.constant 0 : index
    %51 = vector.load %arg5[%c1_59, %c2_60, %c0_61] : memref<3x3x4xf32, #tpu.memory_space<vmem>>, vector<1x1x4xf32>
    %52 = vector.shape_cast %51 : vector<1x1x4xf32> to vector<4xf32>
    %53 = vector.shape_cast %52 : vector<4xf32> to vector<1x1x4xf32>
    %54 = vector.broadcast %53 : vector<1x1x4xf32> to vector<16x16x4xf32>
    %55 = arith.mulf %50, %54 : vector<16x16x4xf32>
    %56 = arith.addf %49, %55 : vector<16x16x4xf32>
    %c2_62 = arith.constant 2 : index
    %c0_63 = arith.constant 0 : index
    %c0_64 = arith.constant 0 : index
    %57 = vector.load %arg8[%c2_62, %c0_63, %c0_64] : memref<18x18x4xf32, #tpu.memory_space<vmem>>, vector<16x16x4xf32>
    %c2_65 = arith.constant 2 : index
    %c0_66 = arith.constant 0 : index
    %c0_67 = arith.constant 0 : index
    %58 = vector.load %arg5[%c2_65, %c0_66, %c0_67] : memref<3x3x4xf32, #tpu.memory_space<vmem>>, vector<1x1x4xf32>
    %59 = vector.shape_cast %58 : vector<1x1x4xf32> to vector<4xf32>
    %60 = vector.shape_cast %59 : vector<4xf32> to vector<1x1x4xf32>
    %61 = vector.broadcast %60 : vector<1x1x4xf32> to vector<16x16x4xf32>
    %62 = arith.mulf %57, %61 : vector<16x16x4xf32>
    %63 = arith.addf %56, %62 : vector<16x16x4xf32>
    %c2_68 = arith.constant 2 : index
    %c1_69 = arith.constant 1 : index
    %c0_70 = arith.constant 0 : index
    %64 = vector.load %arg8[%c2_68, %c1_69, %c0_70] : memref<18x18x4xf32, #tpu.memory_space<vmem>>, vector<16x16x4xf32>
    %c2_71 = arith.constant 2 : index
    %c1_72 = arith.constant 1 : index
    %c0_73 = arith.constant 0 : index
    %65 = vector.load %arg5[%c2_71, %c1_72, %c0_73] : memref<3x3x4xf32, #tpu.memory_space<vmem>>, vector<1x1x4xf32>
    %66 = vector.shape_cast %65 : vector<1x1x4xf32> to vector<4xf32>
    %67 = vector.shape_cast %66 : vector<4xf32> to vector<1x1x4xf32>
    %68 = vector.broadcast %67 : vector<1x1x4xf32> to vector<16x16x4xf32>
    %69 = arith.mulf %64, %68 : vector<16x16x4xf32>
    %70 = arith.addf %63, %69 : vector<16x16x4xf32>
    %c2_74 = arith.constant 2 : index
    %c2_75 = arith.constant 2 : index
    %c0_76 = arith.constant 0 : index
    %71 = vector.load %arg8[%c2_74, %c2_75, %c0_76] : memref<18x18x4xf32, #tpu.memory_space<vmem>>, vector<16x16x4xf32>
    %c2_77 = arith.constant 2 : index
    %c2_78 = arith.constant 2 : index
    %c0_79 = arith.constant 0 : index
    %72 = vector.load %arg5[%c2_77, %c2_78, %c0_79] : memref<3x3x4xf32, #tpu.memory_space<vmem>>, vector<1x1x4xf32>
    %73 = vector.shape_cast %72 : vector<1x1x4xf32> to vector<4xf32>
    %74 = vector.shape_cast %73 : vector<4xf32> to vector<1x1x4xf32>
    %75 = vector.broadcast %74 : vector<1x1x4xf32> to vector<16x16x4xf32>
    %76 = arith.mulf %71, %75 : vector<16x16x4xf32>
    %77 = arith.addf %70, %76 : vector<16x16x4xf32>
    %c0_80 = arith.constant 0 : index
    %c0_81 = arith.constant 0 : index
    %c0_82 = arith.constant 0 : index
    %c0_83 = arith.constant 0 : index
    %78 = vector.load %arg7[%c0_80, %c0_81, %c0_82, %c0_83] : memref<1x16x16x4xf32, #tpu.memory_space<vmem>>, vector<1x16x16x4xf32>
    %79 = vector.shape_cast %78 : vector<1x16x16x4xf32> to vector<16x16x4xf32>
    %80 = vector.shape_cast %77 : vector<16x16x4xf32> to vector<1x16x16x4xf32>
    tpu.vector_store %arg7[%c0_80, %c0_81, %c0_82, %c0_83], %80 {strides = array<i32>} : memref<1x16x16x4xf32, #tpu.memory_space<vmem>>, vector<1x16x16x4xf32>,
    return
  }
  func.func @transform_0(%arg0: i32, %arg1: i32) -> (i32, i32, i32, i32) {
    %c0_i32 = arith.constant 0 : i32
    %c0_i32_0 = arith.constant 0 : i32
    %c0_i32_1 = arith.constant 0 : i32
    return %arg0, %arg1, %c0_i32, %c0_i32_0 : i32, i32, i32, i32
  }
  func.func @transform_1(%arg0: i32, %arg1: i32) -> (i32, i32, i32, i32) {
    %c0_i32 = arith.constant 0 : i32
    %c0_i32_0 = arith.constant 0 : i32
    %c0_i32_1 = arith.constant 0 : i32
    return %arg0, %arg1, %c0_i32, %c0_i32_0 : i32, i32, i32, i32
  }
  func.func @transform_2(%arg0: i32, %arg1: i32) -> (i32, i32, i32, i32) {
    %c0_i32 = arith.constant 0 : i32
    %c0_i32_0 = arith.constant 0 : i32
    %c0_i32_1 = arith.constant 0 : i32
    return %arg0, %arg1, %c0_i32, %c0_i32_0 : i32, i32, i32, i32
  }
  func.func @transform_3(%arg0: i32, %arg1: i32) -> (i32, i32, i32) {
    %c0_i32 = arith.constant 0 : i32
    %c0_i32_0 = arith.constant 0 : i32
    %c0_i32_1 = arith.constant 0 : i32
    %c0_i32_2 = arith.constant 0 : i32
    return %c0_i32, %c0_i32_0, %c0_i32_1 : i32, i32, i32
  }
  func.func @transform_4(%arg0: i32, %arg1: i32) -> (i32, i32, i32) {
    %c0_i32 = arith.constant 0 : i32
    %c0_i32_0 = arith.constant 0 : i32
    %c0_i32_1 = arith.constant 0 : i32
    %c0_i32_2 = arith.constant 0 : i32
    return %c0_i32, %c0_i32_0, %c0_i32_1 : i32, i32, i32
  }
  func.func @transform_5(%arg0: i32, %arg1: i32) -> (i32, i32, i32, i32) {
    %c0_i32 = arith.constant 0 : i32
    %c0_i32_0 = arith.constant 0 : i32
    %c0_i32_1 = arith.constant 0 : i32
    return %arg0, %arg1, %c0_i32, %c0_i32_0 : i32, i32, i32, i32
  }
}

</mosaic_0001>

<llo_original>
// kernel: tpu_custom_call.1
$region0: #{tpu_custom_call.1}
  #allocation0 [shape = 'u32[]', space=smem, size = 0x4, offset = 0x4, fixed_abs, tag = 'smem constant byte address 0x4 - core index']
  #allocation1 [shape = 'u32[144,128]{1,0:T(1,128)}', space=vmem, size = 0x12000, scoped, tag = 'internal scratch']
  #allocation2 [shape = 'f32[18,18,4]{2,1,0:T(8,128)}', space=vmem, size = 0x36000, scoped, tag = 'scratch operand']
  %s0 = inlined_call_operand.vmem [shape: f32[2,16,16,4], index: 0, kind: input, shape index: {}]
  %s1 = inlined_call_operand.vmem [shape: f32[2,1,16,4], index: 1, kind: input, shape index: {}]
  %s2 = inlined_call_operand.vmem [shape: f32[2,1,16,4], index: 2, kind: input, shape index: {}]
  %s3 = inlined_call_operand.vmem [shape: f32[3,3,4], index: 3, kind: input, shape index: {}]
  %s4 = inlined_call_operand.vmem [shape: f32[1,1,4], index: 4, kind: input, shape index: {}]
  %s5 = inlined_call_operand.vmem [shape: f32[2,16,16,4], index: 5, kind: output, shape index: {}]
  %s6 = sld [smem:[#allocation0]]
  $region53: #{tpu_custom_call.1} parent=0
    _
  %s8 = ssub.s32 1, %s6
  %s9 = scalar_select 0, %s8, %s6
  loop: start=0, step=1, limit=4
  $region2: #{tpu_custom_call.1} parent=0 // loop_pre_header
    _
  $region3: #{tpu_custom_call.1} parent=0 // loop_header
    %s11 = sphi 0, %s15
    %p12 = scmp.ge.s32.totalorder %s11, 4
    %s18 = sphi 0, %s30
    %s19 = sphi 0, %s26
    %s20 = sphi 0, %s18
    %s21 = sphi 0, %s19
    %s22 = sphi 0, %s20
    %s23 = sphi 0, %s21
    %s35 = sphi 0, %s37
    %s38 = sphi 0, %s35
    %s39 = sphi 0, %s38
    %s55 = sphi 0, %s39
    %s63 = sphi 0, %s65
    %s66 = sphi 0, %s63
    %s67 = sphi 0, %s66
    %s83 = sphi 0, %s67
    %s91 = sphi 0, %s93
    %s94 = sphi 0, %s91
    %s95 = sphi 0, %s94
    %s111 = sphi 0, %s95
    %s115 = sphi 0, %s115
    %s117 = sphi 0, %s115
    %s118 = sphi 0, %s117
    %s132 = sphi 0, %s118
    %s136 = sphi 0, %s136
    %s138 = sphi 0, %s136
    %s139 = sphi 0, %s138
    %s153 = sphi 0, %s139
    %s161 = sphi 0, %s163
    %s164 = sphi 0, %s161
    %s165 = sphi 0, %s164
    %s181 = sphi 0, %s165
  $region4: #{tpu_custom_call.1} parent=0 // loop_header_branch
    %14 = sbr.rel (%p12) target = $region8
  $region5: #{tpu_custom_call.1} parent=0 // loop_body
    %s16 = ssub.s32 %s11, 1
    %s17 = ssub.s32 %s11, 2
    %s24 = sadd.s32 1, %s19
    %p25 = scmp.ge.s32.totalorder %s24, 1
    %s26 = scalar_select %p25, 0, %s24
    %s27 = sadd.s32 1, %s18
    %s28 = scalar_select %p25, %s27, %s18
    %p29 = scmp.ge.s32.totalorder %s28, 2
    %s30 = scalar_select %p29, 0, %s28
    %s31 = ssub.s32 %s18, %s30
    %s32 = ssub.s32 %s19, %s26
    %s33 = sor.u32 %s31, %s32
    %p34 = scmp.eq.s32.totalorder %s33, 0
    %s36 = sadd.s32 %s35, 1
    %s37 = scalar_select %p34, %s35, %s36
    %p40 = pneg %p34
    %p41 = scmp.eq.s32.totalorder %s11, 1
    %p42 = por %p40, %p41
    %p43 = scmp.ne.s32.totalorder %s35, %s38
    %p44 = scmp.eq.s32.totalorder %s11, 0
    %p45 = por %p43, %p44
    %p46 = scmp.ne.s32.totalorder %s35, %s38
    %p47 = scmp.eq.s32.totalorder %s16, 1
    %p48 = por %p46, %p47
    %p49 = scmp.ne.s32.totalorder %s38, %s39
    %p50 = scmp.eq.s32.totalorder %s16, 0
    %p51 = por %p49, %p50
    %p52 = scmp.ne.s32.totalorder %s38, %s39
    %p53 = scmp.eq.s32.totalorder %s17, 1
    %p54 = por %p52, %p53
    %p56 = scmp.ne.s32.totalorder %s39, %s55
    %p57 = scmp.eq.s32.totalorder %s17, 0
    %p58 = por %p56, %p57
    %s59 = ssub.s32 %s18, %s30
    %s60 = ssub.s32 %s19, %s26
    %s61 = sor.u32 %s59, %s60
    %p62 = scmp.eq.s32.totalorder %s61, 0
    %s64 = sadd.s32 %s63, 1
    %s65 = scalar_select %p62, %s63, %s64
    %p68 = pneg %p62
    %p69 = scmp.eq.s32.totalorder %s11, 1
    %p70 = por %p68, %p69
    %p71 = scmp.ne.s32.totalorder %s63, %s66
    %p72 = scmp.eq.s32.totalorder %s11, 0
    %p73 = por %p71, %p72
    %p74 = scmp.ne.s32.totalorder %s63, %s66
    %p75 = scmp.eq.s32.totalorder %s16, 1
    %p76 = por %p74, %p75
    %p77 = scmp.ne.s32.totalorder %s66, %s67
    %p78 = scmp.eq.s32.totalorder %s16, 0
    %p79 = por %p77, %p78
    %p80 = scmp.ne.s32.totalorder %s66, %s67
    %p81 = scmp.eq.s32.totalorder %s17, 1
    %p82 = por %p80, %p81
    %p84 = scmp.ne.s32.totalorder %s67, %s83
    %p85 = scmp.eq.s32.totalorder %s17, 0
    %p86 = por %p84, %p85
    %s87 = ssub.s32 %s18, %s30
    %s88 = ssub.s32 %s19, %s26
    %s89 = sor.u32 %s87, %s88
    %p90 = scmp.eq.s32.totalorder %s89, 0
    %s92 = sadd.s32 %s91, 1
    %s93 = scalar_select %p90, %s91, %s92
    %p96 = pneg %p90
    %p97 = scmp.eq.s32.totalorder %s11, 1
    %p98 = por %p96, %p97
    %p99 = scmp.ne.s32.totalorder %s91, %s94
    %p100 = scmp.eq.s32.totalorder %s11, 0
    %p101 = por %p99, %p100
    %p102 = scmp.ne.s32.totalorder %s91, %s94
    %p103 = scmp.eq.s32.totalorder %s16, 1
    %p104 = por %p102, %p103
    %p105 = scmp.ne.s32.totalorder %s94, %s95
    %p106 = scmp.eq.s32.totalorder %s16, 0
    %p107 = por %p105, %p106
    %p108 = scmp.ne.s32.totalorder %s94, %s95
    %p109 = scmp.eq.s32.totalorder %s17, 1
    %p110 = por %p108, %p109
    %p112 = scmp.ne.s32.totalorder %s95, %s111
    %p113 = scmp.eq.s32.totalorder %s17, 0
    %p114 = por %p112, %p113
    %s116 = sadd.s32 %s115, 1
    %p119 = scmp.eq.s32.totalorder %s11, 1
    %p120 = scmp.ne.s32.totalorder %s115, %s117
    %p121 = scmp.eq.s32.totalorder %s11, 0
    %p122 = por %p120, %p121
    %p123 = scmp.ne.s32.totalorder %s115, %s117
    %p124 = scmp.eq.s32.totalorder %s16, 1
    %p125 = por %p123, %p124
    %p126 = scmp.ne.s32.totalorder %s117, %s118
    %p127 = scmp.eq.s32.totalorder %s16, 0
    %p128 = por %p126, %p127
    %p129 = scmp.ne.s32.totalorder %s117, %s118
    %p130 = scmp.eq.s32.totalorder %s17, 1
    %p131 = por %p129, %p130
    %p133 = scmp.ne.s32.totalorder %s118, %s132
    %p134 = scmp.eq.s32.totalorder %s17, 0
    %p135 = por %p133, %p134
    %s137 = sadd.s32 %s136, 1
    %p140 = scmp.eq.s32.totalorder %s11, 1
    %p141 = scmp.ne.s32.totalorder %s136, %s138
    %p142 = scmp.eq.s32.totalorder %s11, 0
    %p143 = por %p141, %p142
    %p144 = scmp.ne.s32.totalorder %s136, %s138
    %p145 = scmp.eq.s32.totalorder %s16, 1
    %p146 = por %p144, %p145
    %p147 = scmp.ne.s32.totalorder %s138, %s139
    %p148 = scmp.eq.s32.totalorder %s16, 0
    %p149 = por %p147, %p148
    %p150 = scmp.ne.s32.totalorder %s138, %s139
    %p151 = scmp.eq.s32.totalorder %s17, 1
    %p152 = por %p150, %p151
    %p154 = scmp.ne.s32.totalorder %s139, %s153
    %p155 = scmp.eq.s32.totalorder %s17, 0
    %p156 = por %p154, %p155
    %s157 = ssub.s32 %s18, %s30
    %s158 = ssub.s32 %s19, %s26
    %s159 = sor.u32 %s157, %s158
    %p160 = scmp.eq.s32.totalorder %s159, 0
    %s162 = sadd.s32 %s161, 1
    %s163 = scalar_select %p160, %s161, %s162
    %p166 = pneg %p160
    %p167 = scmp.eq.s32.totalorder %s11, 1
    %p168 = por %p166, %p167
    %p169 = scmp.ne.s32.totalorder %s161, %s164
    %p170 = scmp.eq.s32.totalorder %s11, 0
    %p171 = por %p169, %p170
    %p172 = scmp.ne.s32.totalorder %s161, %s164
    %p173 = scmp.eq.s32.totalorder %s16, 1
    %p174 = por %p172, %p173
    %p175 = scmp.ne.s32.totalorder %s164, %s165
    %p176 = scmp.eq.s32.totalorder %s16, 0
    %p177 = por %p175, %p176
    %p178 = scmp.ne.s32.totalorder %s164, %s165
    %p179 = scmp.eq.s32.totalorder %s17, 1
    %p180 = por %p178, %p179
    %p182 = scmp.ne.s32.totalorder %s165, %s181
    %p183 = scmp.eq.s32.totalorder %s17, 0
    %p184 = por %p182, %p183
    %p185 = scmp.le.s32.totalorder 1, %s11
    %p186 = scmp.lt.s32.totalorder %s11, 3
    %p187 = pnand %p185, %p186
    %p188 = pneg %p187
    // Predicated region
    $region9: #{tpu_custom_call.1} parent=5 // pred_check
      _
    $region10: #{tpu_custom_call.1} parent=5 // pred_check_branch
      %190 = sbr.rel (%p187) target = $region12
    $region11: #{tpu_custom_call.1} parent=5 // pred_region
      %s191 = ssub.s32 %s11, 1
      // Predicated region
      $region13: #{tpu_custom_call.1} parent=11 // pred_check
        %p192 = pneg %p128
      $region14: #{tpu_custom_call.1} parent=11 // pred_check_branch
        %194 = sbr.rel (%p192) target = $region16
      $region15: #{tpu_custom_call.1} parent=11 // pred_region
        _
      $region16: #{tpu_custom_call.1} parent=11 // pred_fallthru
        _
      // Predicated region
      $region17: #{tpu_custom_call.1} parent=11 // pred_check
        %p195 = pneg %p149
      $region18: #{tpu_custom_call.1} parent=11 // pred_check_branch
        %197 = sbr.rel (%p195) target = $region20
      $region19: #{tpu_custom_call.1} parent=11 // pred_region
        _
      $region20: #{tpu_custom_call.1} parent=11 // pred_fallthru
        _
    $region12: #{tpu_custom_call.1} parent=5 // pred_fallthru
      _
    %p198 = scmp.lt.s32.totalorder %s11, 2
    // Predicated region
    $region21: #{tpu_custom_call.1} parent=5 // pred_check
      %p199 = pneg %p198
    $region22: #{tpu_custom_call.1} parent=5 // pred_check_branch
      %201 = sbr.rel (%p199) target = $region24
    $region23: #{tpu_custom_call.1} parent=5 // pred_region
      // Predicated region
      $region25: #{tpu_custom_call.1} parent=23 // pred_check
        %p202 = pneg %p45
      $region26: #{tpu_custom_call.1} parent=23 // pred_check_branch
        %204 = sbr.rel (%p202) target = $region28
      $region27: #{tpu_custom_call.1} parent=23 // pred_region
        %s205 = smul.u32 16, %s19
        %p206 = scmp.lt.s32.totalorder %s18, 1
        %s207 = scalar_select %p206, %s18, 1
        %p208 = scmp.lt.s32.totalorder %s205, 15
        %s209 = scalar_select %p208, %s205, 15
        %s210 = smul.addr %s209, 2
        %s211 = smul.addr %s207, 32
        %s212 = sadd.s32 %s210, %s211
        %s213 = smul.addr %s212, 8
        %s214 = scalar_lea.vmem %s0, %s213
        %s215 = smul.u32 16, %s19
      $region28: #{tpu_custom_call.1} parent=23 // pred_fallthru
        _
      // Predicated region
      $region29: #{tpu_custom_call.1} parent=23 // pred_check
        %p216 = pneg %p73
      $region30: #{tpu_custom_call.1} parent=23 // pred_check_branch
        %218 = sbr.rel (%p216) target = $region32
      $region31: #{tpu_custom_call.1} parent=23 // pred_region
        %p219 = scmp.lt.s32.totalorder %s18, 1
        %s220 = scalar_select %p219, %s18, 1
        %p221 = scmp.lt.s32.totalorder %s19, 0
        %s222 = scalar_select %p221, %s19, 0
        %s223 = smul.addr %s222, 2
        %s224 = smul.addr %s220, 2
        %s225 = sadd.s32 %s223, %s224
        %s226 = smul.addr %s225, 8
        %s227 = scalar_lea.vmem %s1, %s226
      $region32: #{tpu_custom_call.1} parent=23 // pred_fallthru
        _
      // Predicated region
      $region33: #{tpu_custom_call.1} parent=23 // pred_check
        %p228 = pneg %p101
      $region34: #{tpu_custom_call.1} parent=23 // pred_check_branch
        %230 = sbr.rel (%p228) target = $region36
      $region35: #{tpu_custom_call.1} parent=23 // pred_region
        %p231 = scmp.lt.s32.totalorder %s18, 1
        %s232 = scalar_select %p231, %s18, 1
        %p233 = scmp.lt.s32.totalorder %s19, 0
        %s234 = scalar_select %p233, %s19, 0
        %s235 = smul.addr %s234, 2
        %s236 = smul.addr %s232, 2
        %s237 = sadd.s32 %s235, %s236
        %s238 = smul.addr %s237, 8
        %s239 = scalar_lea.vmem %s2, %s238
      $region36: #{tpu_custom_call.1} parent=23 // pred_fallthru
        _
    $region24: #{tpu_custom_call.1} parent=5 // pred_fallthru
      _
    %p240 = scmp.le.s32.totalorder 1, %s11
    %p241 = scmp.lt.s32.totalorder %s11, 3
    %p242 = pnand %p240, %p241
    %p243 = pneg %p242
    // Predicated region
    $region37: #{tpu_custom_call.1} parent=5 // pred_check
      _
    $region38: #{tpu_custom_call.1} parent=5 // pred_check_branch
      %245 = sbr.rel (%p242) target = $region40
    $region39: #{tpu_custom_call.1} parent=5 // pred_region
      %s246 = ssub.s32 %s11, 1
      %s247 = smul.u32 16, %s21
      %p248 = scmp.lt.s32.totalorder %s20, 1
      %s249 = scalar_select %p248, %s20, 1
      %p250 = scmp.lt.s32.totalorder %s247, 15
      %s251 = scalar_select %p250, %s247, 15
      %s252 = smul.addr %s251, 2
      %s253 = smul.addr %s249, 32
      %s254 = sadd.s32 %s252, %s253
      %s255 = smul.addr %s254, 8
      %s256 = scalar_lea.vmem %s0, %s255
      %p257 = pneg %p51
      %p258 = pneg %p48
      %p259 = scmp.lt.s32.totalorder %s20, 1
      %s260 = scalar_select %p259, %s20, 1
      %p261 = scmp.lt.s32.totalorder %s21, 0
      %s262 = scalar_select %p261, %s21, 0
      %s263 = smul.addr %s262, 2
      %s264 = smul.addr %s260, 2
      %s265 = sadd.s32 %s263, %s264
      %s266 = smul.addr %s265, 8
      %s267 = scalar_lea.vmem %s1, %s266
      %p268 = pneg %p79
      %p269 = pneg %p76
      %p270 = scmp.lt.s32.totalorder %s20, 1
      %s271 = scalar_select %p270, %s20, 1
      %p272 = scmp.lt.s32.totalorder %s21, 0
      %s273 = scalar_select %p272, %s21, 0
      %s274 = smul.addr %s273, 2
      %s275 = smul.addr %s271, 2
      %s276 = sadd.s32 %s274, %s275
      %s277 = smul.addr %s276, 8
      %s278 = scalar_lea.vmem %s2, %s277
      %p279 = pneg %p107
      %p280 = pneg %p104
      %p281 = pneg %p128
      %p282 = pneg %p125
      %p283 = pneg %p149
      %p284 = pneg %p146
      %p285 = pneg %p177
      %p286 = pneg %p174
      %s287 = smul.u32 16, %s21
      %p288 = scmp.lt.s32.totalorder %s20, 1
      %s289 = scalar_select %p288, %s20, 1
      %p290 = scmp.lt.s32.totalorder %s287, 15
      %s291 = scalar_select %p290, %s287, 15
      %s292 = smul.addr %s291, 2
      %s293 = smul.addr %s289, 32
      %s294 = sadd.s32 %s292, %s293
      %s295 = smul.addr %s294, 8
      %s296 = scalar_lea.vmem %s5, %s295
      %s297 = smul.u32 16, %s21
      %p298 = scmp.lt.s32.totalorder %s20, 1
      %s299 = scalar_select %p298, %s20, 1
      %p300 = scmp.lt.s32.totalorder %s297, 15
      %s301 = scalar_select %p300, %s297, 15
      %s302 = smul.addr %s301, 2
      %s303 = smul.addr %s299, 32
      %s304 = sadd.s32 %s302, %s303
      %s305 = smul.addr %s304, 8
      %s306 = scalar_lea.vmem %s0, %s305
      %s307 = smul.u32 16, %s21
      %p308 = scmp.lt.s32.totalorder %s20, 1
      %s309 = scalar_select %p308, %s20, 1
      %p310 = scmp.lt.s32.totalorder %s21, 0
      %s311 = scalar_select %p310, %s21, 0
      %s312 = smul.addr %s311, 2
      %s313 = smul.addr %s309, 2
      %s314 = sadd.s32 %s312, %s313
      %s315 = smul.addr %s314, 8
      %s316 = scalar_lea.vmem %s1, %s315
      %p317 = scmp.lt.s32.totalorder %s20, 1
      %s318 = scalar_select %p317, %s20, 1
      %p319 = scmp.lt.s32.totalorder %s21, 0
      %s320 = scalar_select %p319, %s21, 0
      %s321 = smul.addr %s320, 2
      %s322 = smul.addr %s318, 2
      %s323 = sadd.s32 %s321, %s322
      %s324 = smul.addr %s323, 8
      %s325 = scalar_lea.vmem %s2, %s324
      %s326 = smul.u32 16, %s21
      %p327 = scmp.lt.s32.totalorder %s20, 1
      %s328 = scalar_select %p327, %s20, 1
      %p329 = scmp.lt.s32.totalorder %s326, 15
      %s330 = scalar_select %p329, %s326, 15
      %s331 = smul.addr %s330, 2
      %s332 = smul.addr %s328, 32
      %s333 = sadd.s32 %s331, %s332
      %s334 = smul.addr %s333, 8
      %s335 = scalar_lea.vmem %s5, %s334
      %s336 = smul.u32 16, %s21
      %vm337 = vcmask 24576
      %338 = vst.msk [vmem:[#allocation2] sm:$0x1] %vm337, 0.0
      %339 = vst.msk [vmem:[#allocation2 + $0x18] sm:$0x1] %vm337, 0.0
      %340 = vst.msk [vmem:[#allocation2 + $0x30] sm:$0x1] %vm337, 0.0
      %341 = vst.msk [vmem:[#allocation2 + $0x48] sm:$0x1] %vm337, 0.0
      %342 = vst.msk [vmem:[#allocation2 + $0x60] sm:$0x1] %vm337, 0.0
      %343 = vst.msk [vmem:[#allocation2 + $0x78] sm:$0x1] %vm337, 0.0
      %344 = vst.msk [vmem:[#allocation2 + $0x90] sm:$0x1] %vm337, 0.0
      %345 = vst.msk [vmem:[#allocation2 + $0xa8] sm:$0x1] %vm337, 0.0
      %346 = vst.msk [vmem:[#allocation2 + $0xc0] sm:$0x1] %vm337, 0.0
      %347 = vst.msk [vmem:[#allocation2 + $0xd8] sm:$0x1] %vm337, 0.0
      %348 = vst.msk [vmem:[#allocation2 + $0xf0] sm:$0x1] %vm337, 0.0
      %349 = vst.msk [vmem:[#allocation2 + $0x108] sm:$0x1] %vm337, 0.0
      %350 = vst.msk [vmem:[#allocation2 + $0x120] sm:$0x1] %vm337, 0.0
      %351 = vst.msk [vmem:[#allocation2 + $0x138] sm:$0x1] %vm337, 0.0
      %352 = vst.msk [vmem:[#allocation2 + $0x150] sm:$0x1] %vm337, 0.0
      %353 = vst.msk [vmem:[#allocation2 + $0x168] sm:$0x1] %vm337, 0.0
      %354 = vst.msk [vmem:[#allocation2 + $0x180] sm:$0x1] %vm337, 0.0
      %355 = vst.msk [vmem:[#allocation2 + $0x198] sm:$0x1] %vm337, 0.0
      %356 = vst.msk [vmem:[#allocation2 + $0x11] sm:$0x1] %vm337, 0.0
      %357 = vst.msk [vmem:[#allocation2 + $0x29] sm:$0x1] %vm337, 0.0
      %358 = vst.msk [vmem:[#allocation2 + $0x41] sm:$0x1] %vm337, 0.0
      %359 = vst.msk [vmem:[#allocation2 + $0x59] sm:$0x1] %vm337, 0.0
      %360 = vst.msk [vmem:[#allocation2 + $0x71] sm:$0x1] %vm337, 0.0
      %361 = vst.msk [vmem:[#allocation2 + $0x89] sm:$0x1] %vm337, 0.0
      %362 = vst.msk [vmem:[#allocation2 + $0xa1] sm:$0x1] %vm337, 0.0
      %363 = vst.msk [vmem:[#allocation2 + $0xb9] sm:$0x1] %vm337, 0.0
      %364 = vst.msk [vmem:[#allocation2 + $0xd1] sm:$0x1] %vm337, 0.0
      %365 = vst.msk [vmem:[#allocation2 + $0xe9] sm:$0x1] %vm337, 0.0
      %366 = vst.msk [vmem:[#allocation2 + $0x101] sm:$0x1] %vm337, 0.0
      %367 = vst.msk [vmem:[#allocation2 + $0x119] sm:$0x1] %vm337, 0.0
      %368 = vst.msk [vmem:[#allocation2 + $0x131] sm:$0x1] %vm337, 0.0
      %369 = vst.msk [vmem:[#allocation2 + $0x149] sm:$0x1] %vm337, 0.0
      %370 = vst.msk [vmem:[#allocation2 + $0x161] sm:$0x1] %vm337, 0.0
      %371 = vst.msk [vmem:[#allocation2 + $0x179] sm:$0x1] %vm337, 0.0
      %372 = vst.msk [vmem:[#allocation2 + $0x191] sm:$0x1] %vm337, 0.0
      %373 = vst.msk [vmem:[#allocation2 + $0x1a9] sm:$0x1] %vm337, 0.0
      %v374 = vld [vmem:[%s316] sm:$0xff]
      %v375 = vld [vmem:[%s316 + $0x8] sm:$0xff]
      %vm376 = vcmask 31744
      %377 = vst.msk [vmem:[#allocation2 + $0x1] sm:$0xff] %vm376, %v374
      %378 = vst.msk [vmem:[#allocation2 + $0x9] sm:$0xff] %vm376, %v375
      %v379 = vld [vmem:[%s306] sm:$0xff]
      %v380 = vld [vmem:[%s306 + $0x8] sm:$0xff]
      %v381 = vld [vmem:[%s306 + $0x10] sm:$0xff]
      %v382 = vld [vmem:[%s306 + $0x18] sm:$0xff]
      %v383 = vld [vmem:[%s306 + $0x20] sm:$0xff]
      %v384 = vld [vmem:[%s306 + $0x28] sm:$0xff]
      %v385 = vld [vmem:[%s306 + $0x30] sm:$0xff]
      %v386 = vld [vmem:[%s306 + $0x38] sm:$0xff]
      %v387 = vld [vmem:[%s306 + $0x40] sm:$0xff]
      %v388 = vld [vmem:[%s306 + $0x48] sm:$0xff]
      %v389 = vld [vmem:[%s306 + $0x50] sm:$0xff]
      %v390 = vld [vmem:[%s306 + $0x58] sm:$0xff]
      %v391 = vld [vmem:[%s306 + $0x60] sm:$0xff]
      %v392 = vld [vmem:[%s306 + $0x68] sm:$0xff]
      %v393 = vld [vmem:[%s306 + $0x70] sm:$0xff]
      %v394 = vld [vmem:[%s306 + $0x78] sm:$0xff]
      %v395 = vld [vmem:[%s306 + $0x80] sm:$0xff]
      %v396 = vld [vmem:[%s306 + $0x88] sm:$0xff]
      %v397 = vld [vmem:[%s306 + $0x90] sm:$0xff]
      %v398 = vld [vmem:[%s306 + $0x98] sm:$0xff]
      %v399 = vld [vmem:[%s306 + $0xa0] sm:$0xff]
      %v400 = vld [vmem:[%s306 + $0xa8] sm:$0xff]
      %v401 = vld [vmem:[%s306 + $0xb0] sm:$0xff]
      %v402 = vld [vmem:[%s306 + $0xb8] sm:$0xff]
      %v403 = vld [vmem:[%s306 + $0xc0] sm:$0xff]
      %v404 = vld [vmem:[%s306 + $0xc8] sm:$0xff]
      %v405 = vld [vmem:[%s306 + $0xd0] sm:$0xff]
      %v406 = vld [vmem:[%s306 + $0xd8] sm:$0xff]
      %v407 = vld [vmem:[%s306 + $0xe0] sm:$0xff]
      %v408 = vld [vmem:[%s306 + $0xe8] sm:$0xff]
      %v409 = vld [vmem:[%s306 + $0xf0] sm:$0xff]
      %v410 = vld [vmem:[%s306 + $0xf8] sm:$0xff]
      %s411 = scalar_lea.vmem [#allocation2], 24
      %412 = vst.msk [vmem:[%s411 + $0x1] sm:$0xff] %vm376, %v379
      %413 = vst.msk [vmem:[%s411 + $0x9] sm:$0xff] %vm376, %v380
      %414 = vst.msk [vmem:[%s411 + $0x19] sm:$0xff] %vm376, %v381
      %415 = vst.msk [vmem:[%s411 + $0x21] sm:$0xff] %vm376, %v382
      %416 = vst.msk [vmem:[%s411 + $0x31] sm:$0xff] %vm376, %v383
      %417 = vst.msk [vmem:[%s411 + $0x39] sm:$0xff] %vm376, %v384
      %418 = vst.msk [vmem:[%s411 + $0x49] sm:$0xff] %vm376, %v385
      %419 = vst.msk [vmem:[%s411 + $0x51] sm:$0xff] %vm376, %v386
      %420 = vst.msk [vmem:[%s411 + $0x61] sm:$0xff] %vm376, %v387
      %421 = vst.msk [vmem:[%s411 + $0x69] sm:$0xff] %vm376, %v388
      %422 = vst.msk [vmem:[%s411 + $0x79] sm:$0xff] %vm376, %v389
      %423 = vst.msk [vmem:[%s411 + $0x81] sm:$0xff] %vm376, %v390
      %424 = vst.msk [vmem:[%s411 + $0x91] sm:$0xff] %vm376, %v391
      %425 = vst.msk [vmem:[%s411 + $0x99] sm:$0xff] %vm376, %v392
      %426 = vst.msk [vmem:[%s411 + $0xa9] sm:$0xff] %vm376, %v393
      %427 = vst.msk [vmem:[%s411 + $0xb1] sm:$0xff] %vm376, %v394
      %428 = vst.msk [vmem:[%s411 + $0xc1] sm:$0xff] %vm376, %v395
      %429 = vst.msk [vmem:[%s411 + $0xc9] sm:$0xff] %vm376, %v396
      %430 = vst.msk [vmem:[%s411 + $0xd9] sm:$0xff] %vm376, %v397
      %431 = vst.msk [vmem:[%s411 + $0xe1] sm:$0xff] %vm376, %v398
      %432 = vst.msk [vmem:[%s411 + $0xf1] sm:$0xff] %vm376, %v399
      %433 = vst.msk [vmem:[%s411 + $0xf9] sm:$0xff] %vm376, %v400
      %434 = vst.msk [vmem:[%s411 + $0x109] sm:$0xff] %vm376, %v401
      %435 = vst.msk [vmem:[%s411 + $0x111] sm:$0xff] %vm376, %v402
      %436 = vst.msk [vmem:[%s411 + $0x121] sm:$0xff] %vm376, %v403
      %437 = vst.msk [vmem:[%s411 + $0x129] sm:$0xff] %vm376, %v404
      %438 = vst.msk [vmem:[%s411 + $0x139] sm:$0xff] %vm376, %v405
      %439 = vst.msk [vmem:[%s411 + $0x141] sm:$0xff] %vm376, %v406
      %440 = vst.msk [vmem:[%s411 + $0x151] sm:$0xff] %vm376, %v407
      %441 = vst.msk [vmem:[%s411 + $0x159] sm:$0xff] %vm376, %v408
      %442 = vst.msk [vmem:[%s411 + $0x169] sm:$0xff] %vm376, %v409
      %443 = vst.msk [vmem:[%s411 + $0x171] sm:$0xff] %vm376, %v410
      %v444 = vld [vmem:[%s325] sm:$0xff]
      %v445 = vld [vmem:[%s325 + $0x8] sm:$0xff]
      %s446 = scalar_lea.vmem [#allocation2], 408
      %447 = vst.msk [vmem:[%s446 + $0x1] sm:$0xff] %vm376, %v444
      %448 = vst.msk [vmem:[%s446 + $0x9] sm:$0xff] %vm376, %v445
      %v449 = vld [vmem:[%s4] sm:$0x1]
      %v451 = vlaneseq
      %v452 = vshrl.u32 %v451, 7
      %v453 = vsub.s32 0, %v452
      %v454 = vrot.slane %v449, %v453
      %v456 = vld [vmem:[#allocation2] sm:$0xff]
      %v457 = vld [vmem:[#allocation2 + $0x8] sm:$0xff]
      %v458 = vld [vmem:[#allocation2 + $0x18] sm:$0xff]
      %v459 = vld [vmem:[#allocation2 + $0x20] sm:$0xff]
      %v460 = vld [vmem:[#allocation2 + $0x30] sm:$0xff]
      %v461 = vld [vmem:[#allocation2 + $0x38] sm:$0xff]
      %v462 = vld [vmem:[#allocation2 + $0x48] sm:$0xff]
      %v463 = vld [vmem:[#allocation2 + $0x50] sm:$0xff]
      %v464 = vld [vmem:[#allocation2 + $0x60] sm:$0xff]
      %v465 = vld [vmem:[#allocation2 + $0x68] sm:$0xff]
      %v466 = vld [vmem:[#allocation2 + $0x78] sm:$0xff]
      %v467 = vld [vmem:[#allocation2 + $0x80] sm:$0xff]
      %v468 = vld [vmem:[#allocation2 + $0x90] sm:$0xff]
      %v469 = vld [vmem:[#allocation2 + $0x98] sm:$0xff]
      %v470 = vld [vmem:[#allocation2 + $0xa8] sm:$0xff]
      %v471 = vld [vmem:[#allocation2 + $0xb0] sm:$0xff]
      %v472 = vld [vmem:[#allocation2 + $0xc0] sm:$0xff]
      %v473 = vld [vmem:[#allocation2 + $0xc8] sm:$0xff]
      %v474 = vld [vmem:[#allocation2 + $0xd8] sm:$0xff]
      %v475 = vld [vmem:[#allocation2 + $0xe0] sm:$0xff]
      %v476 = vld [vmem:[#allocation2 + $0xf0] sm:$0xff]
      %v477 = vld [vmem:[#allocation2 + $0xf8] sm:$0xff]
      %v478 = vld [vmem:[#allocation2 + $0x108] sm:$0xff]
      %v479 = vld [vmem:[#allocation2 + $0x110] sm:$0xff]
      %v480 = vld [vmem:[#allocation2 + $0x120] sm:$0xff]
      %v481 = vld [vmem:[#allocation2 + $0x128] sm:$0xff]
      %v482 = vld [vmem:[#allocation2 + $0x138] sm:$0xff]
      %v483 = vld [vmem:[#allocation2 + $0x140] sm:$0xff]
      %v484 = vld [vmem:[#allocation2 + $0x150] sm:$0xff]
      %v485 = vld [vmem:[#allocation2 + $0x158] sm:$0xff]
      %v486 = vld [vmem:[#allocation2 + $0x168] sm:$0xff]
      %v487 = vld [vmem:[#allocation2 + $0x170] sm:$0xff]
      %v488 = vld [vmem:[%s3] sm:$0x1]
      %v489 = vlaneseq
      %v490 = vshrl.u32 %v489, 7
      %v491 = vsub.s32 0, %v490
      %v492 = vrot.slane %v488, %v491
      %v493 = vmul.f32 %v456, %v492
      %v494 = vmul.f32 %v457, %v492
      %v495 = vmul.f32 %v458, %v492
      %v496 = vmul.f32 %v459, %v492
      %v497 = vmul.f32 %v460, %v492
      %v498 = vmul.f32 %v461, %v492
      %v499 = vmul.f32 %v462, %v492
      %v500 = vmul.f32 %v463, %v492
      %v501 = vmul.f32 %v464, %v492
      %v502 = vmul.f32 %v465, %v492
      %v503 = vmul.f32 %v466, %v492
      %v504 = vmul.f32 %v467, %v492
      %v505 = vmul.f32 %v468, %v492
      %v506 = vmul.f32 %v469, %v492
      %v507 = vmul.f32 %v470, %v492
      %v508 = vmul.f32 %v471, %v492
      %v509 = vmul.f32 %v472, %v492
      %v510 = vmul.f32 %v473, %v492
      %v511 = vmul.f32 %v474, %v492
      %v512 = vmul.f32 %v475, %v492
      %v513 = vmul.f32 %v476, %v492
      %v514 = vmul.f32 %v477, %v492
      %v515 = vmul.f32 %v478, %v492
      %v516 = vmul.f32 %v479, %v492
      %v517 = vmul.f32 %v480, %v492
      %v518 = vmul.f32 %v481, %v492
      %v519 = vmul.f32 %v482, %v492
      %v520 = vmul.f32 %v483, %v492
      %v521 = vmul.f32 %v484, %v492
      %v522 = vmul.f32 %v485, %v492
      %v523 = vmul.f32 %v486, %v492
      %v524 = vmul.f32 %v487, %v492
      %v525 = vadd.f32 %v454, %v493
      %v526 = vadd.f32 %v454, %v494
      %v527 = vadd.f32 %v454, %v495
      %v528 = vadd.f32 %v454, %v496
      %v529 = vadd.f32 %v454, %v497
      %v530 = vadd.f32 %v454, %v498
      %v531 = vadd.f32 %v454, %v499
      %v532 = vadd.f32 %v454, %v500
      %v533 = vadd.f32 %v454, %v501
      %v534 = vadd.f32 %v454, %v502
      %v535 = vadd.f32 %v454, %v503
      %v536 = vadd.f32 %v454, %v504
      %v537 = vadd.f32 %v454, %v505
      %v538 = vadd.f32 %v454, %v506
      %v539 = vadd.f32 %v454, %v507
      %v540 = vadd.f32 %v454, %v508
      %v541 = vadd.f32 %v454, %v509
      %v542 = vadd.f32 %v454, %v510
      %v543 = vadd.f32 %v454, %v511
      %v544 = vadd.f32 %v454, %v512
      %v545 = vadd.f32 %v454, %v513
      %v546 = vadd.f32 %v454, %v514
      %v547 = vadd.f32 %v454, %v515
      %v548 = vadd.f32 %v454, %v516
      %v549 = vadd.f32 %v454, %v517
      %v550 = vadd.f32 %v454, %v518
      %v551 = vadd.f32 %v454, %v519
      %v552 = vadd.f32 %v454, %v520
      %v553 = vadd.f32 %v454, %v521
      %v554 = vadd.f32 %v454, %v522
      %v555 = vadd.f32 %v454, %v523
      %v556 = vadd.f32 %v454, %v524
      %v557 = vld [vmem:[#allocation2 + $0x1] sm:$0xff]
      %v558 = vld [vmem:[#allocation2 + $0x9] sm:$0xff]
      %v559 = vld [vmem:[#allocation2 + $0x19] sm:$0xff]
      %v560 = vld [vmem:[#allocation2 + $0x21] sm:$0xff]
      %v561 = vld [vmem:[#allocation2 + $0x31] sm:$0xff]
      %v562 = vld [vmem:[#allocation2 + $0x39] sm:$0xff]
      %v563 = vld [vmem:[#allocation2 + $0x49] sm:$0xff]
      %v564 = vld [vmem:[#allocation2 + $0x51] sm:$0xff]
      %v565 = vld [vmem:[#allocation2 + $0x61] sm:$0xff]
      %v566 = vld [vmem:[#allocation2 + $0x69] sm:$0xff]
      %v567 = vld [vmem:[#allocation2 + $0x79] sm:$0xff]
      %v568 = vld [vmem:[#allocation2 + $0x81] sm:$0xff]
      %v569 = vld [vmem:[#allocation2 + $0x91] sm:$0xff]
      %v570 = vld [vmem:[#allocation2 + $0x99] sm:$0xff]
      %v571 = vld [vmem:[#allocation2 + $0xa9] sm:$0xff]
      %v572 = vld [vmem:[#allocation2 + $0xb1] sm:$0xff]
      %v573 = vld [vmem:[#allocation2 + $0xc1] sm:$0xff]
      %v574 = vld [vmem:[#allocation2 + $0xc9] sm:$0xff]
      %v575 = vld [vmem:[#allocation2 + $0xd9] sm:$0xff]
      %v576 = vld [vmem:[#allocation2 + $0xe1] sm:$0xff]
      %v577 = vld [vmem:[#allocation2 + $0xf1] sm:$0xff]
      %v578 = vld [vmem:[#allocation2 + $0xf9] sm:$0xff]
      %v579 = vld [vmem:[#allocation2 + $0x109] sm:$0xff]
      %v580 = vld [vmem:[#allocation2 + $0x111] sm:$0xff]
      %v581 = vld [vmem:[#allocation2 + $0x121] sm:$0xff]
      %v582 = vld [vmem:[#allocation2 + $0x129] sm:$0xff]
      %v583 = vld [vmem:[#allocation2 + $0x139] sm:$0xff]
      %v584 = vld [vmem:[#allocation2 + $0x141] sm:$0xff]
      %v585 = vld [vmem:[#allocation2 + $0x151] sm:$0xff]
      %v586 = vld [vmem:[#allocation2 + $0x159] sm:$0xff]
      %v587 = vld [vmem:[#allocation2 + $0x169] sm:$0xff]
      %v588 = vld [vmem:[#allocation2 + $0x171] sm:$0xff]
      %v589 = vld [vmem:[%s3 + $0x1] sm:$0x1]
      %v590 = vlaneseq
      %v591 = vshrl.u32 %v590, 7
      %v592 = vsub.s32 0, %v591
      %v593 = vrot.slane %v589, %v592
      %v594 = vmul.f32 %v557, %v593
      %v595 = vmul.f32 %v558, %v593
      %v596 = vmul.f32 %v559, %v593
      %v597 = vmul.f32 %v560, %v593
      %v598 = vmul.f32 %v561, %v593
      %v599 = vmul.f32 %v562, %v593
      %v600 = vmul.f32 %v563, %v593
      %v601 = vmul.f32 %v564, %v593
      %v602 = vmul.f32 %v565, %v593
      %v603 = vmul.f32 %v566, %v593
      %v604 = vmul.f32 %v567, %v593
      %v605 = vmul.f32 %v568, %v593
      %v606 = vmul.f32 %v569, %v593
      %v607 = vmul.f32 %v570, %v593
      %v608 = vmul.f32 %v571, %v593
      %v609 = vmul.f32 %v572, %v593
      %v610 = vmul.f32 %v573, %v593
      %v611 = vmul.f32 %v574, %v593
      %v612 = vmul.f32 %v575, %v593
      %v613 = vmul.f32 %v576, %v593
      %v614 = vmul.f32 %v577, %v593
      %v615 = vmul.f32 %v578, %v593
      %v616 = vmul.f32 %v579, %v593
      %v617 = vmul.f32 %v580, %v593
      %v618 = vmul.f32 %v581, %v593
      %v619 = vmul.f32 %v582, %v593
      %v620 = vmul.f32 %v583, %v593
      %v621 = vmul.f32 %v584, %v593
      %v622 = vmul.f32 %v585, %v593
      %v623 = vmul.f32 %v586, %v593
      %v624 = vmul.f32 %v587, %v593
      %v625 = vmul.f32 %v588, %v593
      %v626 = vadd.f32 %v525, %v594
      %v627 = vadd.f32 %v526, %v595
      %v628 = vadd.f32 %v527, %v596
      %v629 = vadd.f32 %v528, %v597
      %v630 = vadd.f32 %v529, %v598
      %v631 = vadd.f32 %v530, %v599
      %v632 = vadd.f32 %v531, %v600
      %v633 = vadd.f32 %v532, %v601
      %v634 = vadd.f32 %v533, %v602
      %v635 = vadd.f32 %v534, %v603
      %v636 = vadd.f32 %v535, %v604
      %v637 = vadd.f32 %v536, %v605
      %v638 = vadd.f32 %v537, %v606
      %v639 = vadd.f32 %v538, %v607
      %v640 = vadd.f32 %v539, %v608
      %v641 = vadd.f32 %v540, %v609
      %v642 = vadd.f32 %v541, %v610
      %v643 = vadd.f32 %v542, %v611
      %v644 = vadd.f32 %v543, %v612
      %v645 = vadd.f32 %v544, %v613
      %v646 = vadd.f32 %v545, %v614
      %v647 = vadd.f32 %v546, %v615
      %v648 = vadd.f32 %v547, %v616
      %v649 = vadd.f32 %v548, %v617
      %v650 = vadd.f32 %v549, %v618
      %v651 = vadd.f32 %v550, %v619
      %v652 = vadd.f32 %v551, %v620
      %v653 = vadd.f32 %v552, %v621
      %v654 = vadd.f32 %v553, %v622
      %v655 = vadd.f32 %v554, %v623
      %v656 = vadd.f32 %v555, %v624
      %v657 = vadd.f32 %v556, %v625
      %v658 = vld [vmem:[#allocation2 + $0x2] sm:$0xff]
      %v659 = vld [vmem:[#allocation2 + $0xa] sm:$0xff]
      %v660 = vld [vmem:[#allocation2 + $0x1a] sm:$0xff]
      %v661 = vld [vmem:[#allocation2 + $0x22] sm:$0xff]
      %v662 = vld [vmem:[#allocation2 + $0x32] sm:$0xff]
      %v663 = vld [vmem:[#allocation2 + $0x3a] sm:$0xff]
      %v664 = vld [vmem:[#allocation2 + $0x4a] sm:$0xff]
      %v665 = vld [vmem:[#allocation2 + $0x52] sm:$0xff]
      %v666 = vld [vmem:[#allocation2 + $0x62] sm:$0xff]
      %v667 = vld [vmem:[#allocation2 + $0x6a] sm:$0xff]
      %v668 = vld [vmem:[#allocation2 + $0x7a] sm:$0xff]
      %v669 = vld [vmem:[#allocation2 + $0x82] sm:$0xff]
      %v670 = vld [vmem:[#allocation2 + $0x92] sm:$0xff]
      %v671 = vld [vmem:[#allocation2 + $0x9a] sm:$0xff]
      %v672 = vld [vmem:[#allocation2 + $0xaa] sm:$0xff]
      %v673 = vld [vmem:[#allocation2 + $0xb2] sm:$0xff]
      %v674 = vld [vmem:[#allocation2 + $0xc2] sm:$0xff]
      %v675 = vld [vmem:[#allocation2 + $0xca] sm:$0xff]
      %v676 = vld [vmem:[#allocation2 + $0xda] sm:$0xff]
      %v677 = vld [vmem:[#allocation2 + $0xe2] sm:$0xff]
      %v678 = vld [vmem:[#allocation2 + $0xf2] sm:$0xff]
      %v679 = vld [vmem:[#allocation2 + $0xfa] sm:$0xff]
      %v680 = vld [vmem:[#allocation2 + $0x10a] sm:$0xff]
      %v681 = vld [vmem:[#allocation2 + $0x112] sm:$0xff]
      %v682 = vld [vmem:[#allocation2 + $0x122] sm:$0xff]
      %v683 = vld [vmem:[#allocation2 + $0x12a] sm:$0xff]
      %v684 = vld [vmem:[#allocation2 + $0x13a] sm:$0xff]
      %v685 = vld [vmem:[#allocation2 + $0x142] sm:$0xff]
      %v686 = vld [vmem:[#allocation2 + $0x152] sm:$0xff]
      %v687 = vld [vmem:[#allocation2 + $0x15a] sm:$0xff]
      %v688 = vld [vmem:[#allocation2 + $0x16a] sm:$0xff]
      %v689 = vld [vmem:[#allocation2 + $0x172] sm:$0xff]
      %v690 = vld [vmem:[%s3 + $0x2] sm:$0x1]
      %v691 = vlaneseq
      %v692 = vshrl.u32 %v691, 7
      %v693 = vsub.s32 0, %v692
      %v694 = vrot.slane %v690, %v693
      %v695 = vmul.f32 %v658, %v694
      %v696 = vmul.f32 %v659, %v694
      %v697 = vmul.f32 %v660, %v694
      %v698 = vmul.f32 %v661, %v694
      %v699 = vmul.f32 %v662, %v694
      %v700 = vmul.f32 %v663, %v694
      %v701 = vmul.f32 %v664, %v694
      %v702 = vmul.f32 %v665, %v694
      %v703 = vmul.f32 %v666, %v694
      %v704 = vmul.f32 %v667, %v694
      %v705 = vmul.f32 %v668, %v694
      %v706 = vmul.f32 %v669, %v694
      %v707 = vmul.f32 %v670, %v694
      %v708 = vmul.f32 %v671, %v694
      %v709 = vmul.f32 %v672, %v694
      %v710 = vmul.f32 %v673, %v694
      %v711 = vmul.f32 %v674, %v694
      %v712 = vmul.f32 %v675, %v694
      %v713 = vmul.f32 %v676, %v694
      %v714 = vmul.f32 %v677, %v694
      %v715 = vmul.f32 %v678, %v694
      %v716 = vmul.f32 %v679, %v694
      %v717 = vmul.f32 %v680, %v694
      %v718 = vmul.f32 %v681, %v694
      %v719 = vmul.f32 %v682, %v694
      %v720 = vmul.f32 %v683, %v694
      %v721 = vmul.f32 %v684, %v694
      %v722 = vmul.f32 %v685, %v694
      %v723 = vmul.f32 %v686, %v694
      %v724 = vmul.f32 %v687, %v694
      %v725 = vmul.f32 %v688, %v694
      %v726 = vmul.f32 %v689, %v694
      %v727 = vadd.f32 %v626, %v695
      %v728 = vadd.f32 %v627, %v696
      %v729 = vadd.f32 %v628, %v697
      %v730 = vadd.f32 %v629, %v698
      %v731 = vadd.f32 %v630, %v699
      %v732 = vadd.f32 %v631, %v700
      %v733 = vadd.f32 %v632, %v701
      %v734 = vadd.f32 %v633, %v702
      %v735 = vadd.f32 %v634, %v703
      %v736 = vadd.f32 %v635, %v704
      %v737 = vadd.f32 %v636, %v705
      %v738 = vadd.f32 %v637, %v706
      %v739 = vadd.f32 %v638, %v707
      %v740 = vadd.f32 %v639, %v708
      %v741 = vadd.f32 %v640, %v709
      %v742 = vadd.f32 %v641, %v710
      %v743 = vadd.f32 %v642, %v711
      %v744 = vadd.f32 %v643, %v712
      %v745 = vadd.f32 %v644, %v713
      %v746 = vadd.f32 %v645, %v714
      %v747 = vadd.f32 %v646, %v715
      %v748 = vadd.f32 %v647, %v716
      %v749 = vadd.f32 %v648, %v717
      %v750 = vadd.f32 %v649, %v718
      %v751 = vadd.f32 %v650, %v719
      %v752 = vadd.f32 %v651, %v720
      %v753 = vadd.f32 %v652, %v721
      %v754 = vadd.f32 %v653, %v722
      %v755 = vadd.f32 %v654, %v723
      %v756 = vadd.f32 %v655, %v724
      %v757 = vadd.f32 %v656, %v725
      %v758 = vadd.f32 %v657, %v726
      %v759 = vld [vmem:[%s411] sm:$0xff]
      %v760 = vld [vmem:[%s411 + $0x8] sm:$0xff]
      %v761 = vld [vmem:[%s411 + $0x18] sm:$0xff]
      %v762 = vld [vmem:[%s411 + $0x20] sm:$0xff]
      %v763 = vld [vmem:[%s411 + $0x30] sm:$0xff]
      %v764 = vld [vmem:[%s411 + $0x38] sm:$0xff]
      %v765 = vld [vmem:[%s411 + $0x48] sm:$0xff]
      %v766 = vld [vmem:[%s411 + $0x50] sm:$0xff]
      %v767 = vld [vmem:[%s411 + $0x60] sm:$0xff]
      %v768 = vld [vmem:[%s411 + $0x68] sm:$0xff]
      %v769 = vld [vmem:[%s411 + $0x78] sm:$0xff]
      %v770 = vld [vmem:[%s411 + $0x80] sm:$0xff]
      %v771 = vld [vmem:[%s411 + $0x90] sm:$0xff]
      %v772 = vld [vmem:[%s411 + $0x98] sm:$0xff]
      %v773 = vld [vmem:[%s411 + $0xa8] sm:$0xff]
      %v774 = vld [vmem:[%s411 + $0xb0] sm:$0xff]
      %v775 = vld [vmem:[%s411 + $0xc0] sm:$0xff]
      %v776 = vld [vmem:[%s411 + $0xc8] sm:$0xff]
      %v777 = vld [vmem:[%s411 + $0xd8] sm:$0xff]
      %v778 = vld [vmem:[%s411 + $0xe0] sm:$0xff]
      %v779 = vld [vmem:[%s411 + $0xf0] sm:$0xff]
      %v780 = vld [vmem:[%s411 + $0xf8] sm:$0xff]
      %v781 = vld [vmem:[%s411 + $0x108] sm:$0xff]
      %v782 = vld [vmem:[%s411 + $0x110] sm:$0xff]
      %v783 = vld [vmem:[%s411 + $0x120] sm:$0xff]
      %v784 = vld [vmem:[%s411 + $0x128] sm:$0xff]
      %v785 = vld [vmem:[%s411 + $0x138] sm:$0xff]
      %v786 = vld [vmem:[%s411 + $0x140] sm:$0xff]
      %v787 = vld [vmem:[%s411 + $0x150] sm:$0xff]
      %v788 = vld [vmem:[%s411 + $0x158] sm:$0xff]
      %v789 = vld [vmem:[%s411 + $0x168] sm:$0xff]
      %v790 = vld [vmem:[%s411 + $0x170] sm:$0xff]
      %s791 = scalar_lea.vmem %s3, 4
      %v792 = vld [vmem:[%s791] sm:$0x1]
      %v793 = vlaneseq
      %v794 = vshrl.u32 %v793, 7
      %v795 = vsub.s32 0, %v794
      %v796 = vrot.slane %v792, %v795
      %v797 = vmul.f32 %v759, %v796
      %v798 = vmul.f32 %v760, %v796
      %v799 = vmul.f32 %v761, %v796
      %v800 = vmul.f32 %v762, %v796
      %v801 = vmul.f32 %v763, %v796
      %v802 = vmul.f32 %v764, %v796
      %v803 = vmul.f32 %v765, %v796
      %v804 = vmul.f32 %v766, %v796
      %v805 = vmul.f32 %v767, %v796
      %v806 = vmul.f32 %v768, %v796
      %v807 = vmul.f32 %v769, %v796
      %v808 = vmul.f32 %v770, %v796
      %v809 = vmul.f32 %v771, %v796
      %v810 = vmul.f32 %v772, %v796
      %v811 = vmul.f32 %v773, %v796
      %v812 = vmul.f32 %v774, %v796
      %v813 = vmul.f32 %v775, %v796
      %v814 = vmul.f32 %v776, %v796
      %v815 = vmul.f32 %v777, %v796
      %v816 = vmul.f32 %v778, %v796
      %v817 = vmul.f32 %v779, %v796
      %v818 = vmul.f32 %v780, %v796
      %v819 = vmul.f32 %v781, %v796
      %v820 = vmul.f32 %v782, %v796
      %v821 = vmul.f32 %v783, %v796
      %v822 = vmul.f32 %v784, %v796
      %v823 = vmul.f32 %v785, %v796
      %v824 = vmul.f32 %v786, %v796
      %v825 = vmul.f32 %v787, %v796
      %v826 = vmul.f32 %v788, %v796
      %v827 = vmul.f32 %v789, %v796
      %v828 = vmul.f32 %v790, %v796
      %v829 = vadd.f32 %v727, %v797
      %v830 = vadd.f32 %v728, %v798
      %v831 = vadd.f32 %v729, %v799
      %v832 = vadd.f32 %v730, %v800
      %v833 = vadd.f32 %v731, %v801
      %v834 = vadd.f32 %v732, %v802
      %v835 = vadd.f32 %v733, %v803
      %v836 = vadd.f32 %v734, %v804
      %v837 = vadd.f32 %v735, %v805
      %v838 = vadd.f32 %v736, %v806
      %v839 = vadd.f32 %v737, %v807
      %v840 = vadd.f32 %v738, %v808
      %v841 = vadd.f32 %v739, %v809
      %v842 = vadd.f32 %v740, %v810
      %v843 = vadd.f32 %v741, %v811
      %v844 = vadd.f32 %v742, %v812
      %v845 = vadd.f32 %v743, %v813
      %v846 = vadd.f32 %v744, %v814
      %v847 = vadd.f32 %v745, %v815
      %v848 = vadd.f32 %v746, %v816
      %v849 = vadd.f32 %v747, %v817
      %v850 = vadd.f32 %v748, %v818
      %v851 = vadd.f32 %v749, %v819
      %v852 = vadd.f32 %v750, %v820
      %v853 = vadd.f32 %v751, %v821
      %v854 = vadd.f32 %v752, %v822
      %v855 = vadd.f32 %v753, %v823
      %v856 = vadd.f32 %v754, %v824
      %v857 = vadd.f32 %v755, %v825
      %v858 = vadd.f32 %v756, %v826
      %v859 = vadd.f32 %v757, %v827
      %v860 = vadd.f32 %v758, %v828
      %v861 = vld [vmem:[%s411 + $0x1] sm:$0xff]
      %v862 = vld [vmem:[%s411 + $0x9] sm:$0xff]
      %v863 = vld [vmem:[%s411 + $0x19] sm:$0xff]
      %v864 = vld [vmem:[%s411 + $0x21] sm:$0xff]
      %v865 = vld [vmem:[%s411 + $0x31] sm:$0xff]
      %v866 = vld [vmem:[%s411 + $0x39] sm:$0xff]
      %v867 = vld [vmem:[%s411 + $0x49] sm:$0xff]
      %v868 = vld [vmem:[%s411 + $0x51] sm:$0xff]
      %v869 = vld [vmem:[%s411 + $0x61] sm:$0xff]
      %v870 = vld [vmem:[%s411 + $0x69] sm:$0xff]
      %v871 = vld [vmem:[%s411 + $0x79] sm:$0xff]
      %v872 = vld [vmem:[%s411 + $0x81] sm:$0xff]
      %v873 = vld [vmem:[%s411 + $0x91] sm:$0xff]
      %v874 = vld [vmem:[%s411 + $0x99] sm:$0xff]
      %v875 = vld [vmem:[%s411 + $0xa9] sm:$0xff]
      %v876 = vld [vmem:[%s411 + $0xb1] sm:$0xff]
      %v877 = vld [vmem:[%s411 + $0xc1] sm:$0xff]
      %v878 = vld [vmem:[%s411 + $0xc9] sm:$0xff]
      %v879 = vld [vmem:[%s411 + $0xd9] sm:$0xff]
      %v880 = vld [vmem:[%s411 + $0xe1] sm:$0xff]
      %v881 = vld [vmem:[%s411 + $0xf1] sm:$0xff]
      %v882 = vld [vmem:[%s411 + $0xf9] sm:$0xff]
      %v883 = vld [vmem:[%s411 + $0x109] sm:$0xff]
      %v884 = vld [vmem:[%s411 + $0x111] sm:$0xff]
      %v885 = vld [vmem:[%s411 + $0x121] sm:$0xff]
      %v886 = vld [vmem:[%s411 + $0x129] sm:$0xff]
      %v887 = vld [vmem:[%s411 + $0x139] sm:$0xff]
      %v888 = vld [vmem:[%s411 + $0x141] sm:$0xff]
      %v889 = vld [vmem:[%s411 + $0x151] sm:$0xff]
      %v890 = vld [vmem:[%s411 + $0x159] sm:$0xff]
      %v891 = vld [vmem:[%s411 + $0x169] sm:$0xff]
      %v892 = vld [vmem:[%s411 + $0x171] sm:$0xff]
      %v893 = vld [vmem:[%s791 + $0x1] sm:$0x1]
      %v894 = vlaneseq
      %v895 = vshrl.u32 %v894, 7
      %v896 = vsub.s32 0, %v895
      %v897 = vrot.slane %v893, %v896
      %v898 = vmul.f32 %v861, %v897
      %v899 = vmul.f32 %v862, %v897
      %v900 = vmul.f32 %v863, %v897
      %v901 = vmul.f32 %v864, %v897
      %v902 = vmul.f32 %v865, %v897
      %v903 = vmul.f32 %v866, %v897
      %v904 = vmul.f32 %v867, %v897
      %v905 = vmul.f32 %v868, %v897
      %v906 = vmul.f32 %v869, %v897
      %v907 = vmul.f32 %v870, %v897
      %v908 = vmul.f32 %v871, %v897
      %v909 = vmul.f32 %v872, %v897
      %v910 = vmul.f32 %v873, %v897
      %v911 = vmul.f32 %v874, %v897
      %v912 = vmul.f32 %v875, %v897
      %v913 = vmul.f32 %v876, %v897
      %v914 = vmul.f32 %v877, %v897
      %v915 = vmul.f32 %v878, %v897
      %v916 = vmul.f32 %v879, %v897
      %v917 = vmul.f32 %v880, %v897
      %v918 = vmul.f32 %v881, %v897
      %v919 = vmul.f32 %v882, %v897
      %v920 = vmul.f32 %v883, %v897
      %v921 = vmul.f32 %v884, %v897
      %v922 = vmul.f32 %v885, %v897
      %v923 = vmul.f32 %v886, %v897
      %v924 = vmul.f32 %v887, %v897
      %v925 = vmul.f32 %v888, %v897
      %v926 = vmul.f32 %v889, %v897
      %v927 = vmul.f32 %v890, %v897
      %v928 = vmul.f32 %v891, %v897
      %v929 = vmul.f32 %v892, %v897
      %v930 = vadd.f32 %v829, %v898
      %v931 = vadd.f32 %v830, %v899
      %v932 = vadd.f32 %v831, %v900
      %v933 = vadd.f32 %v832, %v901
      %v934 = vadd.f32 %v833, %v902
      %v935 = vadd.f32 %v834, %v903
      %v936 = vadd.f32 %v835, %v904
      %v937 = vadd.f32 %v836, %v905
      %v938 = vadd.f32 %v837, %v906
      %v939 = vadd.f32 %v838, %v907
      %v940 = vadd.f32 %v839, %v908
      %v941 = vadd.f32 %v840, %v909
      %v942 = vadd.f32 %v841, %v910
      %v943 = vadd.f32 %v842, %v911
      %v944 = vadd.f32 %v843, %v912
      %v945 = vadd.f32 %v844, %v913
      %v946 = vadd.f32 %v845, %v914
      %v947 = vadd.f32 %v846, %v915
      %v948 = vadd.f32 %v847, %v916
      %v949 = vadd.f32 %v848, %v917
      %v950 = vadd.f32 %v849, %v918
      %v951 = vadd.f32 %v850, %v919
      %v952 = vadd.f32 %v851, %v920
      %v953 = vadd.f32 %v852, %v921
      %v954 = vadd.f32 %v853, %v922
      %v955 = vadd.f32 %v854, %v923
      %v956 = vadd.f32 %v855, %v924
      %v957 = vadd.f32 %v856, %v925
      %v958 = vadd.f32 %v857, %v926
      %v959 = vadd.f32 %v858, %v927
      %v960 = vadd.f32 %v859, %v928
      %v961 = vadd.f32 %v860, %v929
      %v962 = vld [vmem:[%s411 + $0x2] sm:$0xff]
      %v963 = vld [vmem:[%s411 + $0xa] sm:$0xff]
      %v964 = vld [vmem:[%s411 + $0x1a] sm:$0xff]
      %v965 = vld [vmem:[%s411 + $0x22] sm:$0xff]
      %v966 = vld [vmem:[%s411 + $0x32] sm:$0xff]
      %v967 = vld [vmem:[%s411 + $0x3a] sm:$0xff]
      %v968 = vld [vmem:[%s411 + $0x4a] sm:$0xff]
      %v969 = vld [vmem:[%s411 + $0x52] sm:$0xff]
      %v970 = vld [vmem:[%s411 + $0x62] sm:$0xff]
      %v971 = vld [vmem:[%s411 + $0x6a] sm:$0xff]
      %v972 = vld [vmem:[%s411 + $0x7a] sm:$0xff]
      %v973 = vld [vmem:[%s411 + $0x82] sm:$0xff]
      %v974 = vld [vmem:[%s411 + $0x92] sm:$0xff]
      %v975 = vld [vmem:[%s411 + $0x9a] sm:$0xff]
      %v976 = vld [vmem:[%s411 + $0xaa] sm:$0xff]
      %v977 = vld [vmem:[%s411 + $0xb2] sm:$0xff]
      %v978 = vld [vmem:[%s411 + $0xc2] sm:$0xff]
      %v979 = vld [vmem:[%s411 + $0xca] sm:$0xff]
      %v980 = vld [vmem:[%s411 + $0xda] sm:$0xff]
      %v981 = vld [vmem:[%s411 + $0xe2] sm:$0xff]
      %v982 = vld [vmem:[%s411 + $0xf2] sm:$0xff]
      %v983 = vld [vmem:[%s411 + $0xfa] sm:$0xff]
      %v984 = vld [vmem:[%s411 + $0x10a] sm:$0xff]
      %v985 = vld [vmem:[%s411 + $0x112] sm:$0xff]
      %v986 = vld [vmem:[%s411 + $0x122] sm:$0xff]
      %v987 = vld [vmem:[%s411 + $0x12a] sm:$0xff]
      %v988 = vld [vmem:[%s411 + $0x13a] sm:$0xff]
      %v989 = vld [vmem:[%s411 + $0x142] sm:$0xff]
      %v990 = vld [vmem:[%s411 + $0x152] sm:$0xff]
      %v991 = vld [vmem:[%s411 + $0x15a] sm:$0xff]
      %v992 = vld [vmem:[%s411 + $0x16a] sm:$0xff]
      %v993 = vld [vmem:[%s411 + $0x172] sm:$0xff]
      %v994 = vld [vmem:[%s791 + $0x2] sm:$0x1]
      %v995 = vlaneseq
      %v996 = vshrl.u32 %v995, 7
      %v997 = vsub.s32 0, %v996
      %v998 = vrot.slane %v994, %v997
      %v999 = vmul.f32 %v962, %v998
      %v1000 = vmul.f32 %v963, %v998
      %v1001 = vmul.f32 %v964, %v998
      %v1002 = vmul.f32 %v965, %v998
      %v1003 = vmul.f32 %v966, %v998
      %v1004 = vmul.f32 %v967, %v998
      %v1005 = vmul.f32 %v968, %v998
      %v1006 = vmul.f32 %v969, %v998
      %v1007 = vmul.f32 %v970, %v998
      %v1008 = vmul.f32 %v971, %v998
      %v1009 = vmul.f32 %v972, %v998
      %v1010 = vmul.f32 %v973, %v998
      %v1011 = vmul.f32 %v974, %v998
      %v1012 = vmul.f32 %v975, %v998
      %v1013 = vmul.f32 %v976, %v998
      %v1014 = vmul.f32 %v977, %v998
      %v1015 = vmul.f32 %v978, %v998
      %v1016 = vmul.f32 %v979, %v998
      %v1017 = vmul.f32 %v980, %v998
      %v1018 = vmul.f32 %v981, %v998
      %v1019 = vmul.f32 %v982, %v998
      %v1020 = vmul.f32 %v983, %v998
      %v1021 = vmul.f32 %v984, %v998
      %v1022 = vmul.f32 %v985, %v998
      %v1023 = vmul.f32 %v986, %v998
      %v1024 = vmul.f32 %v987, %v998
      %v1025 = vmul.f32 %v988, %v998
      %v1026 = vmul.f32 %v989, %v998
      %v1027 = vmul.f32 %v990, %v998
      %v1028 = vmul.f32 %v991, %v998
      %v1029 = vmul.f32 %v992, %v998
      %v1030 = vmul.f32 %v993, %v998
      %v1031 = vadd.f32 %v930, %v999
      %v1032 = vadd.f32 %v931, %v1000
      %v1033 = vadd.f32 %v932, %v1001
      %v1034 = vadd.f32 %v933, %v1002
      %v1035 = vadd.f32 %v934, %v1003
      %v1036 = vadd.f32 %v935, %v1004
      %v1037 = vadd.f32 %v936, %v1005
      %v1038 = vadd.f32 %v937, %v1006
      %v1039 = vadd.f32 %v938, %v1007
      %v1040 = vadd.f32 %v939, %v1008
      %v1041 = vadd.f32 %v940, %v1009
      %v1042 = vadd.f32 %v941, %v1010
      %v1043 = vadd.f32 %v942, %v1011
      %v1044 = vadd.f32 %v943, %v1012
      %v1045 = vadd.f32 %v944, %v1013
      %v1046 = vadd.f32 %v945, %v1014
      %v1047 = vadd.f32 %v946, %v1015
      %v1048 = vadd.f32 %v947, %v1016
      %v1049 = vadd.f32 %v948, %v1017
      %v1050 = vadd.f32 %v949, %v1018
      %v1051 = vadd.f32 %v950, %v1019
      %v1052 = vadd.f32 %v951, %v1020
      %v1053 = vadd.f32 %v952, %v1021
      %v1054 = vadd.f32 %v953, %v1022
      %v1055 = vadd.f32 %v954, %v1023
      %v1056 = vadd.f32 %v955, %v1024
      %v1057 = vadd.f32 %v956, %v1025
      %v1058 = vadd.f32 %v957, %v1026
      %v1059 = vadd.f32 %v958, %v1027
      %v1060 = vadd.f32 %v959, %v1028
      %v1061 = vadd.f32 %v960, %v1029
      %v1062 = vadd.f32 %v961, %v1030
      %s1063 = scalar_lea.vmem [#allocation2], 48
      %v1064 = vld [vmem:[%s1063] sm:$0xff]
      %v1065 = vld [vmem:[%s1063 + $0x8] sm:$0xff]
      %v1066 = vld [vmem:[%s1063 + $0x18] sm:$0xff]
      %v1067 = vld [vmem:[%s1063 + $0x20] sm:$0xff]
      %v1068 = vld [vmem:[%s1063 + $0x30] sm:$0xff]
      %v1069 = vld [vmem:[%s1063 + $0x38] sm:$0xff]
      %v1070 = vld [vmem:[%s1063 + $0x48] sm:$0xff]
      %v1071 = vld [vmem:[%s1063 + $0x50] sm:$0xff]
      %v1072 = vld [vmem:[%s1063 + $0x60] sm:$0xff]
      %v1073 = vld [vmem:[%s1063 + $0x68] sm:$0xff]
      %v1074 = vld [vmem:[%s1063 + $0x78] sm:$0xff]
      %v1075 = vld [vmem:[%s1063 + $0x80] sm:$0xff]
      %v1076 = vld [vmem:[%s1063 + $0x90] sm:$0xff]
      %v1077 = vld [vmem:[%s1063 + $0x98] sm:$0xff]
      %v1078 = vld [vmem:[%s1063 + $0xa8] sm:$0xff]
      %v1079 = vld [vmem:[%s1063 + $0xb0] sm:$0xff]
      %v1080 = vld [vmem:[%s1063 + $0xc0] sm:$0xff]
      %v1081 = vld [vmem:[%s1063 + $0xc8] sm:$0xff]
      %v1082 = vld [vmem:[%s1063 + $0xd8] sm:$0xff]
      %v1083 = vld [vmem:[%s1063 + $0xe0] sm:$0xff]
      %v1084 = vld [vmem:[%s1063 + $0xf0] sm:$0xff]
      %v1085 = vld [vmem:[%s1063 + $0xf8] sm:$0xff]
      %v1086 = vld [vmem:[%s1063 + $0x108] sm:$0xff]
      %v1087 = vld [vmem:[%s1063 + $0x110] sm:$0xff]
      %v1088 = vld [vmem:[%s1063 + $0x120] sm:$0xff]
      %v1089 = vld [vmem:[%s1063 + $0x128] sm:$0xff]
      %v1090 = vld [vmem:[%s1063 + $0x138] sm:$0xff]
      %v1091 = vld [vmem:[%s1063 + $0x140] sm:$0xff]
      %v1092 = vld [vmem:[%s1063 + $0x150] sm:$0xff]
      %v1093 = vld [vmem:[%s1063 + $0x158] sm:$0xff]
      %v1094 = vld [vmem:[%s1063 + $0x168] sm:$0xff]
      %v1095 = vld [vmem:[%s1063 + $0x170] sm:$0xff]
      %s1096 = scalar_lea.vmem %s3, 8
      %v1097 = vld [vmem:[%s1096] sm:$0x1]
      %v1098 = vlaneseq
      %v1099 = vshrl.u32 %v1098, 7
      %v1100 = vsub.s32 0, %v1099
      %v1101 = vrot.slane %v1097, %v1100
      %v1102 = vmul.f32 %v1064, %v1101
      %v1103 = vmul.f32 %v1065, %v1101
      %v1104 = vmul.f32 %v1066, %v1101
      %v1105 = vmul.f32 %v1067, %v1101
      %v1106 = vmul.f32 %v1068, %v1101
      %v1107 = vmul.f32 %v1069, %v1101
      %v1108 = vmul.f32 %v1070, %v1101
      %v1109 = vmul.f32 %v1071, %v1101
      %v1110 = vmul.f32 %v1072, %v1101
      %v1111 = vmul.f32 %v1073, %v1101
      %v1112 = vmul.f32 %v1074, %v1101
      %v1113 = vmul.f32 %v1075, %v1101
      %v1114 = vmul.f32 %v1076, %v1101
      %v1115 = vmul.f32 %v1077, %v1101
      %v1116 = vmul.f32 %v1078, %v1101
      %v1117 = vmul.f32 %v1079, %v1101
      %v1118 = vmul.f32 %v1080, %v1101
      %v1119 = vmul.f32 %v1081, %v1101
      %v1120 = vmul.f32 %v1082, %v1101
      %v1121 = vmul.f32 %v1083, %v1101
      %v1122 = vmul.f32 %v1084, %v1101
      %v1123 = vmul.f32 %v1085, %v1101
      %v1124 = vmul.f32 %v1086, %v1101
      %v1125 = vmul.f32 %v1087, %v1101
      %v1126 = vmul.f32 %v1088, %v1101
      %v1127 = vmul.f32 %v1089, %v1101
      %v1128 = vmul.f32 %v1090, %v1101
      %v1129 = vmul.f32 %v1091, %v1101
      %v1130 = vmul.f32 %v1092, %v1101
      %v1131 = vmul.f32 %v1093, %v1101
      %v1132 = vmul.f32 %v1094, %v1101
      %v1133 = vmul.f32 %v1095, %v1101
      %v1134 = vadd.f32 %v1031, %v1102
      %v1135 = vadd.f32 %v1032, %v1103
      %v1136 = vadd.f32 %v1033, %v1104
      %v1137 = vadd.f32 %v1034, %v1105
      %v1138 = vadd.f32 %v1035, %v1106
      %v1139 = vadd.f32 %v1036, %v1107
      %v1140 = vadd.f32 %v1037, %v1108
      %v1141 = vadd.f32 %v1038, %v1109
      %v1142 = vadd.f32 %v1039, %v1110
      %v1143 = vadd.f32 %v1040, %v1111
      %v1144 = vadd.f32 %v1041, %v1112
      %v1145 = vadd.f32 %v1042, %v1113
      %v1146 = vadd.f32 %v1043, %v1114
      %v1147 = vadd.f32 %v1044, %v1115
      %v1148 = vadd.f32 %v1045, %v1116
      %v1149 = vadd.f32 %v1046, %v1117
      %v1150 = vadd.f32 %v1047, %v1118
      %v1151 = vadd.f32 %v1048, %v1119
      %v1152 = vadd.f32 %v1049, %v1120
      %v1153 = vadd.f32 %v1050, %v1121
      %v1154 = vadd.f32 %v1051, %v1122
      %v1155 = vadd.f32 %v1052, %v1123
      %v1156 = vadd.f32 %v1053, %v1124
      %v1157 = vadd.f32 %v1054, %v1125
      %v1158 = vadd.f32 %v1055, %v1126
      %v1159 = vadd.f32 %v1056, %v1127
      %v1160 = vadd.f32 %v1057, %v1128
      %v1161 = vadd.f32 %v1058, %v1129
      %v1162 = vadd.f32 %v1059, %v1130
      %v1163 = vadd.f32 %v1060, %v1131
      %v1164 = vadd.f32 %v1061, %v1132
      %v1165 = vadd.f32 %v1062, %v1133
      %v1166 = vld [vmem:[%s1063 + $0x1] sm:$0xff]
      %v1167 = vld [vmem:[%s1063 + $0x9] sm:$0xff]
      %v1168 = vld [vmem:[%s1063 + $0x19] sm:$0xff]
      %v1169 = vld [vmem:[%s1063 + $0x21] sm:$0xff]
      %v1170 = vld [vmem:[%s1063 + $0x31] sm:$0xff]
      %v1171 = vld [vmem:[%s1063 + $0x39] sm:$0xff]
      %v1172 = vld [vmem:[%s1063 + $0x49] sm:$0xff]
      %v1173 = vld [vmem:[%s1063 + $0x51] sm:$0xff]
      %v1174 = vld [vmem:[%s1063 + $0x61] sm:$0xff]
      %v1175 = vld [vmem:[%s1063 + $0x69] sm:$0xff]
      %v1176 = vld [vmem:[%s1063 + $0x79] sm:$0xff]
      %v1177 = vld [vmem:[%s1063 + $0x81] sm:$0xff]
      %v1178 = vld [vmem:[%s1063 + $0x91] sm:$0xff]
      %v1179 = vld [vmem:[%s1063 + $0x99] sm:$0xff]
      %v1180 = vld [vmem:[%s1063 + $0xa9] sm:$0xff]
      %v1181 = vld [vmem:[%s1063 + $0xb1] sm:$0xff]
      %v1182 = vld [vmem:[%s1063 + $0xc1] sm:$0xff]
      %v1183 = vld [vmem:[%s1063 + $0xc9] sm:$0xff]
      %v1184 = vld [vmem:[%s1063 + $0xd9] sm:$0xff]
      %v1185 = vld [vmem:[%s1063 + $0xe1] sm:$0xff]
      %v1186 = vld [vmem:[%s1063 + $0xf1] sm:$0xff]
      %v1187 = vld [vmem:[%s1063 + $0xf9] sm:$0xff]
      %v1188 = vld [vmem:[%s1063 + $0x109] sm:$0xff]
      %v1189 = vld [vmem:[%s1063 + $0x111] sm:$0xff]
      %v1190 = vld [vmem:[%s1063 + $0x121] sm:$0xff]
      %v1191 = vld [vmem:[%s1063 + $0x129] sm:$0xff]
      %v1192 = vld [vmem:[%s1063 + $0x139] sm:$0xff]
      %v1193 = vld [vmem:[%s1063 + $0x141] sm:$0xff]
      %v1194 = vld [vmem:[%s1063 + $0x151] sm:$0xff]
      %v1195 = vld [vmem:[%s1063 + $0x159] sm:$0xff]
      %v1196 = vld [vmem:[%s1063 + $0x169] sm:$0xff]
      %v1197 = vld [vmem:[%s1063 + $0x171] sm:$0xff]
      %v1198 = vld [vmem:[%s1096 + $0x1] sm:$0x1]
      %v1199 = vlaneseq
      %v1200 = vshrl.u32 %v1199, 7
      %v1201 = vsub.s32 0, %v1200
      %v1202 = vrot.slane %v1198, %v1201
      %v1203 = vmul.f32 %v1166, %v1202
      %v1204 = vmul.f32 %v1167, %v1202
      %v1205 = vmul.f32 %v1168, %v1202
      %v1206 = vmul.f32 %v1169, %v1202
      %v1207 = vmul.f32 %v1170, %v1202
      %v1208 = vmul.f32 %v1171, %v1202
      %v1209 = vmul.f32 %v1172, %v1202
      %v1210 = vmul.f32 %v1173, %v1202
      %v1211 = vmul.f32 %v1174, %v1202
      %v1212 = vmul.f32 %v1175, %v1202
      %v1213 = vmul.f32 %v1176, %v1202
      %v1214 = vmul.f32 %v1177, %v1202
      %v1215 = vmul.f32 %v1178, %v1202
      %v1216 = vmul.f32 %v1179, %v1202
      %v1217 = vmul.f32 %v1180, %v1202
      %v1218 = vmul.f32 %v1181, %v1202
      %v1219 = vmul.f32 %v1182, %v1202
      %v1220 = vmul.f32 %v1183, %v1202
      %v1221 = vmul.f32 %v1184, %v1202
      %v1222 = vmul.f32 %v1185, %v1202
      %v1223 = vmul.f32 %v1186, %v1202
      %v1224 = vmul.f32 %v1187, %v1202
      %v1225 = vmul.f32 %v1188, %v1202
      %v1226 = vmul.f32 %v1189, %v1202
      %v1227 = vmul.f32 %v1190, %v1202
      %v1228 = vmul.f32 %v1191, %v1202
      %v1229 = vmul.f32 %v1192, %v1202
      %v1230 = vmul.f32 %v1193, %v1202
      %v1231 = vmul.f32 %v1194, %v1202
      %v1232 = vmul.f32 %v1195, %v1202
      %v1233 = vmul.f32 %v1196, %v1202
      %v1234 = vmul.f32 %v1197, %v1202
      %v1235 = vadd.f32 %v1134, %v1203
      %v1236 = vadd.f32 %v1135, %v1204
      %v1237 = vadd.f32 %v1136, %v1205
      %v1238 = vadd.f32 %v1137, %v1206
      %v1239 = vadd.f32 %v1138, %v1207
      %v1240 = vadd.f32 %v1139, %v1208
      %v1241 = vadd.f32 %v1140, %v1209
      %v1242 = vadd.f32 %v1141, %v1210
      %v1243 = vadd.f32 %v1142, %v1211
      %v1244 = vadd.f32 %v1143, %v1212
      %v1245 = vadd.f32 %v1144, %v1213
      %v1246 = vadd.f32 %v1145, %v1214
      %v1247 = vadd.f32 %v1146, %v1215
      %v1248 = vadd.f32 %v1147, %v1216
      %v1249 = vadd.f32 %v1148, %v1217
      %v1250 = vadd.f32 %v1149, %v1218
      %v1251 = vadd.f32 %v1150, %v1219
      %v1252 = vadd.f32 %v1151, %v1220
      %v1253 = vadd.f32 %v1152, %v1221
      %v1254 = vadd.f32 %v1153, %v1222
      %v1255 = vadd.f32 %v1154, %v1223
      %v1256 = vadd.f32 %v1155, %v1224
      %v1257 = vadd.f32 %v1156, %v1225
      %v1258 = vadd.f32 %v1157, %v1226
      %v1259 = vadd.f32 %v1158, %v1227
      %v1260 = vadd.f32 %v1159, %v1228
      %v1261 = vadd.f32 %v1160, %v1229
      %v1262 = vadd.f32 %v1161, %v1230
      %v1263 = vadd.f32 %v1162, %v1231
      %v1264 = vadd.f32 %v1163, %v1232
      %v1265 = vadd.f32 %v1164, %v1233
      %v1266 = vadd.f32 %v1165, %v1234
      %v1267 = vld [vmem:[%s1063 + $0x2] sm:$0xff]
      %v1268 = vld [vmem:[%s1063 + $0xa] sm:$0xff]
      %v1269 = vld [vmem:[%s1063 + $0x1a] sm:$0xff]
      %v1270 = vld [vmem:[%s1063 + $0x22] sm:$0xff]
      %v1271 = vld [vmem:[%s1063 + $0x32] sm:$0xff]
      %v1272 = vld [vmem:[%s1063 + $0x3a] sm:$0xff]
      %v1273 = vld [vmem:[%s1063 + $0x4a] sm:$0xff]
      %v1274 = vld [vmem:[%s1063 + $0x52] sm:$0xff]
      %v1275 = vld [vmem:[%s1063 + $0x62] sm:$0xff]
      %v1276 = vld [vmem:[%s1063 + $0x6a] sm:$0xff]
      %v1277 = vld [vmem:[%s1063 + $0x7a] sm:$0xff]
      %v1278 = vld [vmem:[%s1063 + $0x82] sm:$0xff]
      %v1279 = vld [vmem:[%s1063 + $0x92] sm:$0xff]
      %v1280 = vld [vmem:[%s1063 + $0x9a] sm:$0xff]
      %v1281 = vld [vmem:[%s1063 + $0xaa] sm:$0xff]
      %v1282 = vld [vmem:[%s1063 + $0xb2] sm:$0xff]
      %v1283 = vld [vmem:[%s1063 + $0xc2] sm:$0xff]
      %v1284 = vld [vmem:[%s1063 + $0xca] sm:$0xff]
      %v1285 = vld [vmem:[%s1063 + $0xda] sm:$0xff]
      %v1286 = vld [vmem:[%s1063 + $0xe2] sm:$0xff]
      %v1287 = vld [vmem:[%s1063 + $0xf2] sm:$0xff]
      %v1288 = vld [vmem:[%s1063 + $0xfa] sm:$0xff]
      %v1289 = vld [vmem:[%s1063 + $0x10a] sm:$0xff]
      %v1290 = vld [vmem:[%s1063 + $0x112] sm:$0xff]
      %v1291 = vld [vmem:[%s1063 + $0x122] sm:$0xff]
      %v1292 = vld [vmem:[%s1063 + $0x12a] sm:$0xff]
      %v1293 = vld [vmem:[%s1063 + $0x13a] sm:$0xff]
      %v1294 = vld [vmem:[%s1063 + $0x142] sm:$0xff]
      %v1295 = vld [vmem:[%s1063 + $0x152] sm:$0xff]
      %v1296 = vld [vmem:[%s1063 + $0x15a] sm:$0xff]
      %v1297 = vld [vmem:[%s1063 + $0x16a] sm:$0xff]
      %v1298 = vld [vmem:[%s1063 + $0x172] sm:$0xff]
      %v1299 = vld [vmem:[%s1096 + $0x2] sm:$0x1]
      %v1300 = vlaneseq
      %v1301 = vshrl.u32 %v1300, 7
      %v1302 = vsub.s32 0, %v1301
      %v1303 = vrot.slane %v1299, %v1302
      %v1304 = vmul.f32 %v1267, %v1303
      %v1305 = vmul.f32 %v1268, %v1303
      %v1306 = vmul.f32 %v1269, %v1303
      %v1307 = vmul.f32 %v1270, %v1303
      %v1308 = vmul.f32 %v1271, %v1303
      %v1309 = vmul.f32 %v1272, %v1303
      %v1310 = vmul.f32 %v1273, %v1303
      %v1311 = vmul.f32 %v1274, %v1303
      %v1312 = vmul.f32 %v1275, %v1303
      %v1313 = vmul.f32 %v1276, %v1303
      %v1314 = vmul.f32 %v1277, %v1303
      %v1315 = vmul.f32 %v1278, %v1303
      %v1316 = vmul.f32 %v1279, %v1303
      %v1317 = vmul.f32 %v1280, %v1303
      %v1318 = vmul.f32 %v1281, %v1303
      %v1319 = vmul.f32 %v1282, %v1303
      %v1320 = vmul.f32 %v1283, %v1303
      %v1321 = vmul.f32 %v1284, %v1303
      %v1322 = vmul.f32 %v1285, %v1303
      %v1323 = vmul.f32 %v1286, %v1303
      %v1324 = vmul.f32 %v1287, %v1303
      %v1325 = vmul.f32 %v1288, %v1303
      %v1326 = vmul.f32 %v1289, %v1303
      %v1327 = vmul.f32 %v1290, %v1303
      %v1328 = vmul.f32 %v1291, %v1303
      %v1329 = vmul.f32 %v1292, %v1303
      %v1330 = vmul.f32 %v1293, %v1303
      %v1331 = vmul.f32 %v1294, %v1303
      %v1332 = vmul.f32 %v1295, %v1303
      %v1333 = vmul.f32 %v1296, %v1303
      %v1334 = vmul.f32 %v1297, %v1303
      %v1335 = vmul.f32 %v1298, %v1303
      %v1336 = vadd.f32 %v1235, %v1304
      %v1337 = vadd.f32 %v1236, %v1305
      %v1338 = vadd.f32 %v1237, %v1306
      %v1339 = vadd.f32 %v1238, %v1307
      %v1340 = vadd.f32 %v1239, %v1308
      %v1341 = vadd.f32 %v1240, %v1309
      %v1342 = vadd.f32 %v1241, %v1310
      %v1343 = vadd.f32 %v1242, %v1311
      %v1344 = vadd.f32 %v1243, %v1312
      %v1345 = vadd.f32 %v1244, %v1313
      %v1346 = vadd.f32 %v1245, %v1314
      %v1347 = vadd.f32 %v1246, %v1315
      %v1348 = vadd.f32 %v1247, %v1316
      %v1349 = vadd.f32 %v1248, %v1317
      %v1350 = vadd.f32 %v1249, %v1318
      %v1351 = vadd.f32 %v1250, %v1319
      %v1352 = vadd.f32 %v1251, %v1320
      %v1353 = vadd.f32 %v1252, %v1321
      %v1354 = vadd.f32 %v1253, %v1322
      %v1355 = vadd.f32 %v1254, %v1323
      %v1356 = vadd.f32 %v1255, %v1324
      %v1357 = vadd.f32 %v1256, %v1325
      %v1358 = vadd.f32 %v1257, %v1326
      %v1359 = vadd.f32 %v1258, %v1327
      %v1360 = vadd.f32 %v1259, %v1328
      %v1361 = vadd.f32 %v1260, %v1329
      %v1362 = vadd.f32 %v1261, %v1330
      %v1363 = vadd.f32 %v1262, %v1331
      %v1364 = vadd.f32 %v1263, %v1332
      %v1365 = vadd.f32 %v1264, %v1333
      %v1366 = vadd.f32 %v1265, %v1334
      %v1367 = vadd.f32 %v1266, %v1335
      %1368 = vst.msk [vmem:[%s335] sm:$0xff] %vm376, %v1336
      %1369 = vst.msk [vmem:[%s335 + $0x8] sm:$0xff] %vm376, %v1337
      %1370 = vst.msk [vmem:[%s335 + $0x10] sm:$0xff] %vm376, %v1338
      %1371 = vst.msk [vmem:[%s335 + $0x18] sm:$0xff] %vm376, %v1339
      %1372 = vst.msk [vmem:[%s335 + $0x20] sm:$0xff] %vm376, %v1340
      %1373 = vst.msk [vmem:[%s335 + $0x28] sm:$0xff] %vm376, %v1341
      %1374 = vst.msk [vmem:[%s335 + $0x30] sm:$0xff] %vm376, %v1342
      %1375 = vst.msk [vmem:[%s335 + $0x38] sm:$0xff] %vm376, %v1343
      %1376 = vst.msk [vmem:[%s335 + $0x40] sm:$0xff] %vm376, %v1344
      %1377 = vst.msk [vmem:[%s335 + $0x48] sm:$0xff] %vm376, %v1345
      %1378 = vst.msk [vmem:[%s335 + $0x50] sm:$0xff] %vm376, %v1346
      %1379 = vst.msk [vmem:[%s335 + $0x58] sm:$0xff] %vm376, %v1347
      %1380 = vst.msk [vmem:[%s335 + $0x60] sm:$0xff] %vm376, %v1348
      %1381 = vst.msk [vmem:[%s335 + $0x68] sm:$0xff] %vm376, %v1349
      %1382 = vst.msk [vmem:[%s335 + $0x70] sm:$0xff] %vm376, %v1350
      %1383 = vst.msk [vmem:[%s335 + $0x78] sm:$0xff] %vm376, %v1351
      %1384 = vst.msk [vmem:[%s335 + $0x80] sm:$0xff] %vm376, %v1352
      %1385 = vst.msk [vmem:[%s335 + $0x88] sm:$0xff] %vm376, %v1353
      %1386 = vst.msk [vmem:[%s335 + $0x90] sm:$0xff] %vm376, %v1354
      %1387 = vst.msk [vmem:[%s335 + $0x98] sm:$0xff] %vm376, %v1355
      %1388 = vst.msk [vmem:[%s335 + $0xa0] sm:$0xff] %vm376, %v1356
      %1389 = vst.msk [vmem:[%s335 + $0xa8] sm:$0xff] %vm376, %v1357
      %1390 = vst.msk [vmem:[%s335 + $0xb0] sm:$0xff] %vm376, %v1358
      %1391 = vst.msk [vmem:[%s335 + $0xb8] sm:$0xff] %vm376, %v1359
      %1392 = vst.msk [vmem:[%s335 + $0xc0] sm:$0xff] %vm376, %v1360
      %1393 = vst.msk [vmem:[%s335 + $0xc8] sm:$0xff] %vm376, %v1361
      %1394 = vst.msk [vmem:[%s335 + $0xd0] sm:$0xff] %vm376, %v1362
      %1395 = vst.msk [vmem:[%s335 + $0xd8] sm:$0xff] %vm376, %v1363
      %1396 = vst.msk [vmem:[%s335 + $0xe0] sm:$0xff] %vm376, %v1364
      %1397 = vst.msk [vmem:[%s335 + $0xe8] sm:$0xff] %vm376, %v1365
      %1398 = vst.msk [vmem:[%s335 + $0xf0] sm:$0xff] %vm376, %v1366
      %1399 = vst.msk [vmem:[%s335 + $0xf8] sm:$0xff] %vm376, %v1367
      %s1400 = smul.u32 16, %s21
      %p1401 = scmp.lt.s32.totalorder %s20, 1
      %s1402 = scalar_select %p1401, %s20, 1
      %p1403 = scmp.lt.s32.totalorder %s1400, 15
      %s1404 = scalar_select %p1403, %s1400, 15
      %s1405 = smul.addr %s1404, 2
      %s1406 = smul.addr %s1402, 32
      %s1407 = sadd.s32 %s1405, %s1406
      %s1408 = smul.addr %s1407, 8
      %s1409 = scalar_lea.vmem %s5, %s1408
      // Predicated region
      $region41: #{tpu_custom_call.1} parent=39 // pred_check
        %p1410 = pneg %p174
      $region42: #{tpu_custom_call.1} parent=39 // pred_check_branch
        %1412 = sbr.rel (%p1410) target = $region44
      $region43: #{tpu_custom_call.1} parent=39 // pred_region
        %s1413 = smul.u32 16, %s21
      $region44: #{tpu_custom_call.1} parent=39 // pred_fallthru
        _
    $region40: #{tpu_custom_call.1} parent=5 // pred_fallthru
      _
    %p1414 = scmp.le.s32.totalorder 2, %s11
    // Predicated region
    $region45: #{tpu_custom_call.1} parent=5 // pred_check
      %p1415 = pneg %p1414
    $region46: #{tpu_custom_call.1} parent=5 // pred_check_branch
      %1417 = sbr.rel (%p1415) target = $region48
    $region47: #{tpu_custom_call.1} parent=5 // pred_region
      %s1418 = ssub.s32 %s11, 2
      // Predicated region
      $region49: #{tpu_custom_call.1} parent=47 // pred_check
        %p1419 = pneg %p180
      $region50: #{tpu_custom_call.1} parent=47 // pred_check_branch
        %1421 = sbr.rel (%p1419) target = $region52
      $region51: #{tpu_custom_call.1} parent=47 // pred_region
        %s1422 = smul.u32 16, %s23
        %p1423 = scmp.lt.s32.totalorder %s22, 1
        %s1424 = scalar_select %p1423, %s22, 1
        %p1425 = scmp.lt.s32.totalorder %s1422, 15
        %s1426 = scalar_select %p1425, %s1422, 15
        %s1427 = smul.addr %s1426, 2
        %s1428 = smul.addr %s1424, 32
        %s1429 = sadd.s32 %s1427, %s1428
        %s1430 = smul.addr %s1429, 8
        %s1431 = scalar_lea.vmem %s5, %s1430
      $region52: #{tpu_custom_call.1} parent=47 // pred_fallthru
        _
    $region48: #{tpu_custom_call.1} parent=5 // pred_fallthru
      _
  $region6: #{tpu_custom_call.1} parent=0 // loop_footer
    %s15 = sadd.s32 1, %s11
  $region7: #{tpu_custom_call.1} parent=0 // loop_footer_branch
    %10 = sbr.rel target = $region3
  $region8: #{tpu_custom_call.1} parent=0 // loop_exit
    _

</llo_original>
